<compile_context>
chip_gen: v7x
topology: tpu7x:2x2x1
jax: 0.10.0
libtpu: 0.0.40
codegen_flags: <defaults>
</compile_context>

<pallas_src>
import jax
import jax.numpy as jnp
from jax.experimental import pallas as pl
from jax.experimental.pallas import tpu as pltpu


# ----------------------------- Pallas kernel --------------------------------
def decoder_kernel(ids_ref,            # VMEM (B, 1)  int32 token ids
                   emb_tbl_ref,        # VMEM (V, E)
                   h_ref, c_ref,       # VMEM (L, B, H)   (aliased with outputs)
                   enc_ref,            # VMEM (B, S, H)
                   attn_ref,           # VMEM (2H+16, H): [w_h; w_e; b@2H; v@2H+8]
                   lstm_ref,           # VMEM (R, H): per-gate packed LSTM weights
                   fc_ref,             # VMEM (2H+8, O):  [w_h; w_c; b@2H]
                   pred_ref,           # VMEM (B, O)
                   h_out_ref,          # VMEM (L, B, H)
                   c_out_ref):         # VMEM (L, B, H)
    L, B, H = h_ref.shape
    S = enc_ref.shape[1]
    V, E = emb_tbl_ref.shape

    # Row offsets into the per-gate packed LSTM buffer (must match pack_params).
    off_ctx = 4 * E                    # layer-0 context input weights, gate-major
    off_x = off_ctx + 4 * H            # layers>0 input weights, layer-major/gate
    off_hh = off_x + 4 * (L - 1) * H   # recurrent weights, gate-major/layer
    off_b = off_hh + 4 * L * H         # bias rows, layer-major/gate

    # ---- Load ALL aliased state up-front.  h_ref/c_ref share buffers with
    # h_out_ref/c_out_ref; every value stored below data-depends on these loads,
    # so read-before-write ordering is guaranteed.  Do not read h_ref/c_ref again.
    h_all = h_ref[...]                       # (L, B, H)
    c_all = c_ref[...]                       # (L, B, H)
    enc = enc_ref[...]                       # (B, S, H)

    # ---------------- embedding: one-hot matmul on the MXU -------------------
    ids = ids_ref[...]                                           # (B, 1) int32
    iota_v = jax.lax.broadcasted_iota(jnp.int32, (B, V), 1)      # (B, V)
    one_hot = (iota_v == ids).astype(jnp.float32)                # (B, V)
    emb = jnp.dot(one_hot, emb_tbl_ref[...],
                  preferred_element_type=jnp.float32)            # (B, E)
    # dropout(embedded) = identity in eval mode.

    # ---------------- chain-independent LSTM terms (hoisted) -----------------
    # Layer-0 embedding-input gate terms: 4 aligned (B,E)x(E,H) dots.
    emb_g = [jnp.dot(emb, lstm_ref[g * E:(g + 1) * E, :],
                     preferred_element_type=jnp.float32) for g in range(4)]
    # Recurrent terms for all layers, batched per gate: h_all[l] @ W_hh[l, g].
    rec_g = []
    for g in range(4):
        w_hh_g = lstm_ref[off_hh + g * L * H: off_hh + (g + 1) * L * H, :]
        w_hh_g = w_hh_g.reshape(L, H, H)
        rec_g.append(jnp.einsum('lbh,lhk->lbk', h_all, w_hh_g,
                                preferred_element_type=jnp.float32))   # (L, B, H)

    # ---------------- attention ----------------
    w_h = attn_ref[0:H, :]                           # (H, H)  acts on hidden[-1]
    w_e = attn_ref[H:2 * H, :]                       # (H, H)  acts on encoder outputs
    a_b = attn_ref[2 * H:2 * H + 1, :]               # (1, H)
    v_row = attn_ref[2 * H + 8:2 * H + 9, :]         # (1, H)

    h_top = h_all[L - 1]                                                     # (B, H)
    part_h = jnp.dot(h_top, w_h, preferred_element_type=jnp.float32)        # (B, H)
    part_e = jnp.dot(enc.reshape(B * S, H), w_e,
                     preferred_element_type=jnp.float32).reshape(B, S, H)   # (B, S, H)
    energy = jnp.tanh(part_e + part_h[:, None, :] + a_b)                    # (B, S, H)
    scores = jnp.sum(energy * v_row, axis=-1)                               # (B, S)

    m = jnp.max(scores, axis=1, keepdims=True)
    e = jnp.exp(scores - m)
    attn = e / jnp.sum(e, axis=1, keepdims=True)     # exact divide (S tiny; bit-accurate)
    context = jnp.sum(attn[:, :, None] * enc, axis=1)                       # (B, H)

    # Context-dependent, chain-independent dots: issue as soon as context exists.
    fc_wc = fc_ref[H:2 * H, :]
    ctx_fc = jnp.dot(context, fc_wc, preferred_element_type=jnp.float32)    # (B, O)
    ctx_g = [jnp.dot(context, lstm_ref[off_ctx + g * H: off_ctx + (g + 1) * H, :],
                     preferred_element_type=jnp.float32) for g in range(4)]

    # ---------------- LSTM stack, single time step (serial chain) ------------
    x = None
    new_h, new_c = [], []
    for l in range(L):
        pre = []
        for g in range(4):
            b_row = lstm_ref[off_b + l * 4 + g: off_b + l * 4 + g + 1, :]   # (1, H)
            if l == 0:
                pre.append(emb_g[g] + ctx_g[g] + rec_g[g][0] + b_row)
            else:
                w_x = lstm_ref[off_x + ((l - 1) * 4 + g) * H:
                               off_x + ((l - 1) * 4 + g + 1) * H, :]        # (H, H)
                pre.append(jnp.dot(x, w_x, preferred_element_type=jnp.float32)
                           + rec_g[g][l] + b_row)
        i_g = jax.nn.sigmoid(pre[0])
        f_g = jax.nn.sigmoid(pre[1])
        g_g = jnp.tanh(pre[2])
        o_g = jax.nn.sigmoid(pre[3])
        c_new = f_g * c_all[l] + i_g * g_g
        h_new = o_g * jnp.tanh(c_new)
        new_h.append(h_new)
        new_c.append(c_new)
        x = h_new            # inter-layer dropout = identity (eval mode)

    # Coalesced state writeback (single store per output, no per-layer sub-tiles).
    h_out_ref[...] = jnp.stack(new_h, axis=0)
    c_out_ref[...] = jnp.stack(new_c, axis=0)

    # ---------------- output projection (split weights, no concat) -----------
    fc_wh = fc_ref[0:H, :]
    fc_b = fc_ref[2 * H:2 * H + 1, :]
    pred_ref[...] = (jnp.dot(x, fc_wh, preferred_element_type=jnp.float32)
                     + ctx_fc + fc_b)


# ----------------------------- parameters ------------------------------------
def make_params(key, output_dim, embed_dim, hidden_dim, num_layers):
    """Logical (split) parameters, equivalent to the PyTorch module's tensors."""
    H, E, L = hidden_dim, embed_dim, num_layers
    keys = jax.random.split(key, 8 + num_layers)
    u = lambda k, shape, s: jax.random.uniform(k, shape, jnp.float32, -s, s)
    k_h = 1.0 / (H ** 0.5)
    k_2h = 1.0 / ((2 * H) ** 0.5)

    p = {}
    p["emb_table"] = jax.random.normal(keys[0], (output_dim, E), jnp.float32)
    # Attention: Linear(2H -> H) split into hidden / encoder halves, plus v (H -> 1).
    p["attn_w_h"] = u(keys[1], (H, H), k_2h)
    p["attn_w_e"] = u(keys[2], (H, H), k_2h)
    p["attn_b"] = u(keys[3], (1, H), k_2h)
    p["v"] = u(keys[4], (1, H), k_h)
    # LSTM: layer 0 input weight split into emb (E,4H) + context (H,4H); layers>0 (H,4H).
    w_ih_x, w_hh, b = [], [], []
    for l in range(L):
        kk = jax.random.split(keys[5 + l], 5)
        if l == 0:
            p["w_ih_emb"] = u(kk[0], (E, 4 * H), k_h)
        w_ih_x.append(u(kk[1], (H, 4 * H), k_h))
        w_hh.append(u(kk[2], (H, 4 * H), k_h))
        b.append(u(kk[3], (4 * H,), k_h) + u(kk[4], (4 * H,), k_h))   # b_ih + b_hh
    p["w_ih_x"] = jnp.stack(w_ih_x)          # (L, H, 4H)
    p["w_hh"] = jnp.stack(w_hh)              # (L, H, 4H)
    p["b"] = jnp.stack(b)                    # (L, 4H)
    # fc_out: Linear(2H -> output_dim) split into h / context halves.
    p["fc_w_h"] = u(keys[5 + L], (H, output_dim), k_2h)
    p["fc_w_c"] = u(keys[6 + L], (H, output_dim), k_2h)
    p["fc_b"] = u(keys[7 + L], (1, output_dim), k_2h)
    return p


def pack_params(p):
    """Pack parameters into contiguous buffers.  LSTM weights are packed PER GATE
    as (K, H) column blocks so all in-kernel gate dots are lane-aligned."""
    H = p["attn_w_h"].shape[0]
    E = p["w_ih_emb"].shape[0]
    L = p["w_hh"].shape[0]
    O = p["fc_w_h"].shape[1]

    attn_pack = jnp.zeros((2 * H + 16, H), jnp.float32)
    attn_pack = attn_pack.at[0:H].set(p["attn_w_h"])
    attn_pack = attn_pack.at[H:2 * H].set(p["attn_w_e"])
    attn_pack = attn_pack.at[2 * H].set(p["attn_b"][0])
    attn_pack = attn_pack.at[2 * H + 8].set(p["v"][0])

    off_ctx = 4 * E
    off_x = off_ctx + 4 * H
    off_hh = off_x + 4 * (L - 1) * H
    off_b = off_hh + 4 * L * H
    rows = off_b + 4 * L
    lstm_pack = jnp.zeros((rows, H), jnp.float32)
    for g in range(4):
        # layer-0 embedding input weights, per gate (E, H)
        lstm_pack = lstm_pack.at[g * E:(g + 1) * E].set(p["w_ih_emb"][:, g * H:(g + 1) * H])
        # layer-0 context input weights, per gate (H, H)
        lstm_pack = lstm_pack.at[off_ctx + g * H:off_ctx + (g + 1) * H].set(
            p["w_ih_x"][0][:, g * H:(g + 1) * H])
        # recurrent weights, gate-major then layer (contiguous (L*H, H) per gate)
        for l in range(L):
            r = off_hh + (g * L + l) * H
            lstm_pack = lstm_pack.at[r:r + H].set(p["w_hh"][l][:, g * H:(g + 1) * H])
    for l in range(1, L):
        for g in range(4):
            r = off_x + ((l - 1) * 4 + g) * H
            lstm_pack = lstm_pack.at[r:r + H].set(p["w_ih_x"][l][:, g * H:(g + 1) * H])
    for l in range(L):
        for g in range(4):
            lstm_pack = lstm_pack.at[off_b + l * 4 + g].set(p["b"][l][g * H:(g + 1) * H])

    fc_pack = jnp.zeros((2 * H + 8, O), jnp.float32)
    fc_pack = fc_pack.at[0:H].set(p["fc_w_h"])
    fc_pack = fc_pack.at[H:2 * H].set(p["fc_w_c"])
    fc_pack = fc_pack.at[2 * H].set(p["fc_b"][0])

    return {"emb_table": p["emb_table"], "attn_pack": attn_pack,
            "lstm_pack": lstm_pack, "fc_pack": fc_pack}


# ----------------------------- wrapper ---------------------------------------
@jax.jit
def decoder_forward(packed, inp, hidden, cell, encoder_outputs):
    """inp: (B,) int32 tokens; hidden/cell: (L,B,H); encoder_outputs: (B,S,H)."""
    L, B, H = hidden.shape
    output_dim = packed["fc_pack"].shape[1]

    vmem = pl.BlockSpec(memory_space=pltpu.MemorySpace.VMEM)
    out_shapes = (
        jax.ShapeDtypeStruct((B, output_dim), jnp.float32),   # prediction
        jax.ShapeDtypeStruct((L, B, H), jnp.float32),          # new hidden
        jax.ShapeDtypeStruct((L, B, H), jnp.float32),          # new cell
    )
    ids2d = inp.reshape(B, 1).astype(jnp.int32)
    return pl.pallas_call(
        decoder_kernel,
        out_shape=out_shapes,
        in_specs=[vmem] * 8,
        out_specs=(vmem, vmem, vmem),
        # hidden -> h_out, cell -> c_out.  Safe because the kernel loads all state
        # before any store and never re-reads h_ref/c_ref afterwards.
        input_output_aliases={2: 1, 3: 2},
    )(ids2d, packed["emb_table"], hidden, cell, encoder_outputs,
      packed["attn_pack"], packed["lstm_pack"], packed["fc_pack"])


# ----------------------------- pure-JAX reference ----------------------------
def decoder_reference(params, inp, hidden, cell, enc):
    L, B, H = hidden.shape
    emb = jnp.take(params["emb_table"], inp, axis=0)                  # (B, E)
    h_top = hidden[-1]
    energy = jnp.tanh(jnp.einsum("bsh,hk->bsk", enc, params["attn_w_e"])
                      + (h_top @ params["attn_w_h"])[:, None, :]
                      + params["attn_b"])
    scores = jnp.einsum("bsh,h->bs", energy, params["v"][0])
    attn = jax.nn.softmax(scores, axis=1)
    context = jnp.einsum("bs,bsh->bh", attn, enc)
    x = None
    new_h, new_c = [], []
    for l in range(L):
        if l == 0:
            gates = emb @ params["w_ih_emb"] + context @ params["w_ih_x"][0]
        else:
            gates = x @ params["w_ih_x"][l]
        gates = gates + hidden[l] @ params["w_hh"][l] + params["b"][l]
        i = jax.nn.sigmoid(gates[:, :H])
        f = jax.nn.sigmoid(gates[:, H:2 * H])
        g = jnp.tanh(gates[:, 2 * H:3 * H])
        o = jax.nn.sigmoid(gates[:, 3 * H:])
        c_new = f * cell[l] + i * g
        h_new = o * jnp.tanh(c_new)
        new_h.append(h_new)
        new_c.append(c_new)
        x = h_new
    pred = x @ params["fc_w_h"] + context @ params["fc_w_c"] + params["fc_b"]
    return pred, jnp.stack(new_h), jnp.stack(new_c)


# ----------------------------- main -------------------------------------------
if __name__ == "__main__":
    output_dim, embed_dim, hidden_dim, num_layers = 32, 16, 32, 2
    B, S = 2, 8

    key = jax.random.PRNGKey(0)
    kp, k1, k2, k3, k4 = jax.random.split(key, 5)

    params = make_params(kp, output_dim, embed_dim, hidden_dim, num_layers)
    packed = pack_params(params)
    inp = jax.random.randint(k1, (B,), 0, output_dim, dtype=jnp.int32)
    hidden = jax.random.normal(k2, (num_layers, B, hidden_dim), jnp.float32)
    cell = jax.random.normal(k3, (num_layers, B, hidden_dim), jnp.float32)
    encoder_outputs = jax.random.normal(k4, (B, S, hidden_dim), jnp.float32)

    pred, new_h, new_c = decoder_forward(packed, inp, hidden, cell, encoder_outputs)
    jax.block_until_ready((pred, new_h, new_c))

    # Correctness check against a pure-JAX reference (exact softmax divide in-kernel,
    # so only fp32 accumulation-order differences remain).
    pred_r, new_h_r, new_c_r = decoder_reference(params, inp, hidden, cell, encoder_outputs)
    assert jnp.allclose(pred, pred_r, rtol=1e-4, atol=1e-4)
    assert jnp.allclose(new_h, new_h_r, rtol=1e-4, atol=1e-4)
    assert jnp.allclose(new_c, new_c_r, rtol=1e-4, atol=1e-4)

    print("KERNEL_OK")
</pallas_src>

<mosaic_0001>
module attributes {stable_mosaic.version = 11 : i64} {
  func.func @decoder_kernel(%arg0: memref<2x1xi32, #tpu.memory_space<vmem>>, %arg1: memref<32x16xf32, #tpu.memory_space<vmem>>, %arg2: memref<2x2x32xf32, #tpu.memory_space<vmem>>, %arg3: memref<2x2x32xf32, #tpu.memory_space<vmem>>, %arg4: memref<2x8x32xf32, #tpu.memory_space<vmem>>, %arg5: memref<80x32xf32, #tpu.memory_space<vmem>>, %arg6: memref<584x32xf32, #tpu.memory_space<vmem>>, %arg7: memref<72x32xf32, #tpu.memory_space<vmem>>, %arg8: memref<2x32xf32, #tpu.memory_space<vmem>>, %arg9: memref<2x2x32xf32, #tpu.memory_space<vmem>>, %arg10: memref<2x2x32xf32, #tpu.memory_space<vmem>>) attributes {dimension_semantics = [], scalar_prefetch = 0 : i64, scratch_operands = 0 : i64, tpu.core_type = #tpu.core_type<tc>} {
    %c0 = arith.constant 0 : index
    %c0_0 = arith.constant 0 : index
    %c0_1 = arith.constant 0 : index
    %0 = vector.load %arg2[%c0, %c0_0, %c0_1] : memref<2x2x32xf32, #tpu.memory_space<vmem>>, vector<2x2x32xf32>
    %c0_2 = arith.constant 0 : index
    %c0_3 = arith.constant 0 : index
    %c0_4 = arith.constant 0 : index
    %1 = vector.load %arg3[%c0_2, %c0_3, %c0_4] : memref<2x2x32xf32, #tpu.memory_space<vmem>>, vector<2x2x32xf32>
    %c0_5 = arith.constant 0 : index
    %c0_6 = arith.constant 0 : index
    %c0_7 = arith.constant 0 : index
    %2 = vector.load %arg4[%c0_5, %c0_6, %c0_7] : memref<2x8x32xf32, #tpu.memory_space<vmem>>, vector<2x8x32xf32>
    %c0_8 = arith.constant 0 : index
    %c0_9 = arith.constant 0 : index
    %3 = vector.load %arg0[%c0_8, %c0_9] : memref<2x1xi32, #tpu.memory_space<vmem>>, vector<2x1xi32>
    %4 = tpu.iota {dimensions = array<i32: 1>} : vector<2x32xi32>
    %5 = vector.broadcast %3 : vector<2x1xi32> to vector<2x32xi32>
    %6 = arith.cmpi eq, %4, %5 : vector<2x32xi32>
    %7 = arith.extui %6 : vector<2x32xi1> to vector<2x32xi32>
    %8 = arith.sitofp %7 : vector<2x32xi32> to vector<2x32xf32>
    %c0_10 = arith.constant 0 : index
    %c0_11 = arith.constant 0 : index
    %9 = vector.load %arg1[%c0_10, %c0_11] : memref<32x16xf32, #tpu.memory_space<vmem>>, vector<32x16xf32>
    %cst = arith.constant dense<0.000000e+00> : vector<2x16xf32>
    %10 = tpu.matmul %8, %9, %cst {dimension_numbers = #tpu.dot_dimension_numbers<[1], [0], [0], [1], [0, 0, 1, 1], [], []>} : vector<2x32xf32>, vector<32x16xf32>, vector<2x16xf32> -> vector<2x16xf32>
    %c0_12 = arith.constant 0 : index
    %c0_13 = arith.constant 0 : index
    %11 = vector.load %arg6[%c0_12, %c0_13] : memref<584x32xf32, #tpu.memory_space<vmem>>, vector<16x32xf32>
    %cst_14 = arith.constant dense<0.000000e+00> : vector<2x32xf32>
    %12 = tpu.matmul %10, %11, %cst_14 {dimension_numbers = #tpu.dot_dimension_numbers<[1], [0], [0], [1], [0, 0, 1, 1], [], []>} : vector<2x16xf32>, vector<16x32xf32>, vector<2x32xf32> -> vector<2x32xf32>
    %c16 = arith.constant 16 : index
    %c0_15 = arith.constant 0 : index
    %13 = vector.load %arg6[%c16, %c0_15] : memref<584x32xf32, #tpu.memory_space<vmem>>, vector<16x32xf32>
    %cst_16 = arith.constant dense<0.000000e+00> : vector<2x32xf32>
    %14 = tpu.matmul %10, %13, %cst_16 {dimension_numbers = #tpu.dot_dimension_numbers<[1], [0], [0], [1], [0, 0, 1, 1], [], []>} : vector<2x16xf32>, vector<16x32xf32>, vector<2x32xf32> -> vector<2x32xf32>
    %c32 = arith.constant 32 : index
    %c0_17 = arith.constant 0 : index
    %15 = vector.load %arg6[%c32, %c0_17] : memref<584x32xf32, #tpu.memory_space<vmem>>, vector<16x32xf32>
    %cst_18 = arith.constant dense<0.000000e+00> : vector<2x32xf32>
    %16 = tpu.matmul %10, %15, %cst_18 {dimension_numbers = #tpu.dot_dimension_numbers<[1], [0], [0], [1], [0, 0, 1, 1], [], []>} : vector<2x16xf32>, vector<16x32xf32>, vector<2x32xf32> -> vector<2x32xf32>
    %c48 = arith.constant 48 : index
    %c0_19 = arith.constant 0 : index
    %17 = vector.load %arg6[%c48, %c0_19] : memref<584x32xf32, #tpu.memory_space<vmem>>, vector<16x32xf32>
    %cst_20 = arith.constant dense<0.000000e+00> : vector<2x32xf32>
    %18 = tpu.matmul %10, %17, %cst_20 {dimension_numbers = #tpu.dot_dimension_numbers<[1], [0], [0], [1], [0, 0, 1, 1], [], []>} : vector<2x16xf32>, vector<16x32xf32>, vector<2x32xf32> -> vector<2x32xf32>
    %c320 = arith.constant 320 : index
    %c0_21 = arith.constant 0 : index
    %19 = vector.load %arg6[%c320, %c0_21] : memref<584x32xf32, #tpu.memory_space<vmem>>, vector<64x32xf32>
    %20 = vector.shape_cast %19 : vector<64x32xf32> to vector<2x32x32xf32>
    "tpu.trace_start"() <{level = 10 : i32, message = "lbh,lhk->lbk"}> : () -> ()
    %cst_22 = arith.constant dense<0.000000e+00> : vector<2x2x32xf32>
    %21 = tpu.matmul %0, %20, %cst_22 {dimension_numbers = #tpu.dot_dimension_numbers<[2], [1], [1], [2], [0, 0, 0, 1, 1, 2], [0], [0]>} : vector<2x2x32xf32>, vector<2x32x32xf32>, vector<2x2x32xf32> -> vector<2x2x32xf32>
    "tpu.trace_stop"() : () -> ()
    %c384 = arith.constant 384 : index
    %c0_23 = arith.constant 0 : index
    %22 = vector.load %arg6[%c384, %c0_23] : memref<584x32xf32, #tpu.memory_space<vmem>>, vector<64x32xf32>
    %23 = vector.shape_cast %22 : vector<64x32xf32> to vector<2x32x32xf32>
    "tpu.trace_start"() <{level = 10 : i32, message = "lbh,lhk->lbk"}> : () -> ()
    %cst_24 = arith.constant dense<0.000000e+00> : vector<2x2x32xf32>
    %24 = tpu.matmul %0, %23, %cst_24 {dimension_numbers = #tpu.dot_dimension_numbers<[2], [1], [1], [2], [0, 0, 0, 1, 1, 2], [0], [0]>} : vector<2x2x32xf32>, vector<2x32x32xf32>, vector<2x2x32xf32> -> vector<2x2x32xf32>
    "tpu.trace_stop"() : () -> ()
    %c448 = arith.constant 448 : index
    %c0_25 = arith.constant 0 : index
    %25 = vector.load %arg6[%c448, %c0_25] : memref<584x32xf32, #tpu.memory_space<vmem>>, vector<64x32xf32>
    %26 = vector.shape_cast %25 : vector<64x32xf32> to vector<2x32x32xf32>
    "tpu.trace_start"() <{level = 10 : i32, message = "lbh,lhk->lbk"}> : () -> ()
    %cst_26 = arith.constant dense<0.000000e+00> : vector<2x2x32xf32>
    %27 = tpu.matmul %0, %26, %cst_26 {dimension_numbers = #tpu.dot_dimension_numbers<[2], [1], [1], [2], [0, 0, 0, 1, 1, 2], [0], [0]>} : vector<2x2x32xf32>, vector<2x32x32xf32>, vector<2x2x32xf32> -> vector<2x2x32xf32>
    "tpu.trace_stop"() : () -> ()
    %c512 = arith.constant 512 : index
    %c0_27 = arith.constant 0 : index
    %28 = vector.load %arg6[%c512, %c0_27] : memref<584x32xf32, #tpu.memory_space<vmem>>, vector<64x32xf32>
    %29 = vector.shape_cast %28 : vector<64x32xf32> to vector<2x32x32xf32>
    "tpu.trace_start"() <{level = 10 : i32, message = "lbh,lhk->lbk"}> : () -> ()
    %cst_28 = arith.constant dense<0.000000e+00> : vector<2x2x32xf32>
    %30 = tpu.matmul %0, %29, %cst_28 {dimension_numbers = #tpu.dot_dimension_numbers<[2], [1], [1], [2], [0, 0, 0, 1, 1, 2], [0], [0]>} : vector<2x2x32xf32>, vector<2x32x32xf32>, vector<2x2x32xf32> -> vector<2x2x32xf32>
    "tpu.trace_stop"() : () -> ()
    %c0_29 = arith.constant 0 : index
    %c0_30 = arith.constant 0 : index
    %31 = vector.load %arg5[%c0_29, %c0_30] : memref<80x32xf32, #tpu.memory_space<vmem>>, vector<32x32xf32>
    %c32_31 = arith.constant 32 : index
    %c0_32 = arith.constant 0 : index
    %32 = vector.load %arg5[%c32_31, %c0_32] : memref<80x32xf32, #tpu.memory_space<vmem>>, vector<32x32xf32>
    %c64 = arith.constant 64 : index
    %c0_33 = arith.constant 0 : index
    %33 = vector.load %arg5[%c64, %c0_33] : memref<80x32xf32, #tpu.memory_space<vmem>>, vector<1x32xf32>
    %c72 = arith.constant 72 : index
    %c0_34 = arith.constant 0 : index
    %34 = vector.load %arg5[%c72, %c0_34] : memref<80x32xf32, #tpu.memory_space<vmem>>, vector<1x32xf32>
    %35 = vector.extract_strided_slice %0 {offsets = [1, 0, 0], sizes = [1, 2, 32], strides = [1, 1, 1]} : vector<2x2x32xf32> to vector<1x2x32xf32>
    %36 = vector.shape_cast %35 : vector<1x2x32xf32> to vector<2x32xf32>
    %cst_35 = arith.constant dense<0.000000e+00> : vector<2x32xf32>
    %37 = tpu.matmul %36, %31, %cst_35 {dimension_numbers = #tpu.dot_dimension_numbers<[1], [0], [0], [1], [0, 0, 1, 1], [], []>} : vector<2x32xf32>, vector<32x32xf32>, vector<2x32xf32> -> vector<2x32xf32>
    %38 = vector.shape_cast %2 : vector<2x8x32xf32> to vector<16x32xf32>
    %cst_36 = arith.constant dense<0.000000e+00> : vector<16x32xf32>
    %39 = tpu.matmul %38, %32, %cst_36 {dimension_numbers = #tpu.dot_dimension_numbers<[1], [0], [0], [1], [0, 0, 1, 1], [], []>} : vector<16x32xf32>, vector<32x32xf32>, vector<16x32xf32> -> vector<16x32xf32>
    %40 = vector.shape_cast %39 : vector<16x32xf32> to vector<2x8x32xf32>
    %41 = vector.shape_cast %37 : vector<2x32xf32> to vector<2x1x32xf32>
    %42 = vector.broadcast %41 : vector<2x1x32xf32> to vector<2x8x32xf32>
    %43 = arith.addf %40, %42 : vector<2x8x32xf32>
    %44 = vector.shape_cast %33 : vector<1x32xf32> to vector<1x1x32xf32>
    %45 = vector.broadcast %44 : vector<1x1x32xf32> to vector<2x8x32xf32>
    %46 = arith.addf %43, %45 : vector<2x8x32xf32>
    %47 = math.tanh %46 : vector<2x8x32xf32>
    %48 = vector.shape_cast %34 : vector<1x32xf32> to vector<1x1x32xf32>
    %49 = vector.broadcast %48 : vector<1x1x32xf32> to vector<2x8x32xf32>
    %50 = arith.mulf %47, %49 : vector<2x8x32xf32>
    %cst_37 = arith.constant dense<0.000000e+00> : vector<2x8xf32>
    %51 = vector.multi_reduction <add>, %50, %cst_37 [2] : vector<2x8x32xf32> to vector<2x8xf32>
    %cst_38 = arith.constant dense<0xFF800000> : vector<2xf32>
    %52 = vector.multi_reduction <maximumf>, %51, %cst_38 [1] : vector<2x8xf32> to vector<2xf32>
    %53 = vector.shape_cast %52 : vector<2xf32> to vector<2x1xf32>
    %54 = vector.broadcast %53 : vector<2x1xf32> to vector<2x8xf32>
    %55 = arith.subf %51, %54 : vector<2x8xf32>
    %56 = math.exp %55 : vector<2x8xf32>
    %cst_39 = arith.constant dense<0.000000e+00> : vector<2xf32>
    %57 = vector.multi_reduction <add>, %56, %cst_39 [1] : vector<2x8xf32> to vector<2xf32>
    %58 = vector.shape_cast %57 : vector<2xf32> to vector<2x1xf32>
    %59 = vector.broadcast %58 : vector<2x1xf32> to vector<2x8xf32>
    %60 = arith.divf %56, %59 : vector<2x8xf32>
    %61 = vector.shape_cast %60 : vector<2x8xf32> to vector<2x8x1xf32>
    %62 = vector.broadcast %61 : vector<2x8x1xf32> to vector<2x8x32xf32>
    %63 = arith.mulf %62, %2 : vector<2x8x32xf32>
    %cst_40 = arith.constant dense<0.000000e+00> : vector<2x32xf32>
    %64 = vector.multi_reduction <add>, %63, %cst_40 [1] : vector<2x8x32xf32> to vector<2x32xf32>
    %c32_41 = arith.constant 32 : index
    %c0_42 = arith.constant 0 : index
    %65 = vector.load %arg7[%c32_41, %c0_42] : memref<72x32xf32, #tpu.memory_space<vmem>>, vector<32x32xf32>
    %cst_43 = arith.constant dense<0.000000e+00> : vector<2x32xf32>
    %66 = tpu.matmul %64, %65, %cst_43 {dimension_numbers = #tpu.dot_dimension_numbers<[1], [0], [0], [1], [0, 0, 1, 1], [], []>} : vector<2x32xf32>, vector<32x32xf32>, vector<2x32xf32> -> vector<2x32xf32>
    %c64_44 = arith.constant 64 : index
    %c0_45 = arith.constant 0 : index
    %67 = vector.load %arg6[%c64_44, %c0_45] : memref<584x32xf32, #tpu.memory_space<vmem>>, vector<32x32xf32>
    %cst_46 = arith.constant dense<0.000000e+00> : vector<2x32xf32>
    %68 = tpu.matmul %64, %67, %cst_46 {dimension_numbers = #tpu.dot_dimension_numbers<[1], [0], [0], [1], [0, 0, 1, 1], [], []>} : vector<2x32xf32>, vector<32x32xf32>, vector<2x32xf32> -> vector<2x32xf32>
    %c96 = arith.constant 96 : index
    %c0_47 = arith.constant 0 : index
    %69 = vector.load %arg6[%c96, %c0_47] : memref<584x32xf32, #tpu.memory_space<vmem>>, vector<32x32xf32>
    %cst_48 = arith.constant dense<0.000000e+00> : vector<2x32xf32>
    %70 = tpu.matmul %64, %69, %cst_48 {dimension_numbers = #tpu.dot_dimension_numbers<[1], [0], [0], [1], [0, 0, 1, 1], [], []>} : vector<2x32xf32>, vector<32x32xf32>, vector<2x32xf32> -> vector<2x32xf32>
    %c128 = arith.constant 128 : index
    %c0_49 = arith.constant 0 : index
    %71 = vector.load %arg6[%c128, %c0_49] : memref<584x32xf32, #tpu.memory_space<vmem>>, vector<32x32xf32>
    %cst_50 = arith.constant dense<0.000000e+00> : vector<2x32xf32>
    %72 = tpu.matmul %64, %71, %cst_50 {dimension_numbers = #tpu.dot_dimension_numbers<[1], [0], [0], [1], [0, 0, 1, 1], [], []>} : vector<2x32xf32>, vector<32x32xf32>, vector<2x32xf32> -> vector<2x32xf32>
    %c160 = arith.constant 160 : index
    %c0_51 = arith.constant 0 : index
    %73 = vector.load %arg6[%c160, %c0_51] : memref<584x32xf32, #tpu.memory_space<vmem>>, vector<32x32xf32>
    %cst_52 = arith.constant dense<0.000000e+00> : vector<2x32xf32>
    %74 = tpu.matmul %64, %73, %cst_52 {dimension_numbers = #tpu.dot_dimension_numbers<[1], [0], [0], [1], [0, 0, 1, 1], [], []>} : vector<2x32xf32>, vector<32x32xf32>, vector<2x32xf32> -> vector<2x32xf32>
    %c576 = arith.constant 576 : index
    %c0_53 = arith.constant 0 : index
    %75 = vector.load %arg6[%c576, %c0_53] : memref<584x32xf32, #tpu.memory_space<vmem>>, vector<1x32xf32>
    %76 = arith.addf %12, %68 : vector<2x32xf32>
    %77 = vector.extract_strided_slice %21 {offsets = [0, 0, 0], sizes = [1, 2, 32], strides = [1, 1, 1]} : vector<2x2x32xf32> to vector<1x2x32xf32>
    %78 = vector.shape_cast %77 : vector<1x2x32xf32> to vector<2x32xf32>
    %79 = arith.addf %76, %78 : vector<2x32xf32>
    %80 = vector.broadcast %75 : vector<1x32xf32> to vector<2x32xf32>
    %81 = arith.addf %79, %80 : vector<2x32xf32>
    %c577 = arith.constant 577 : index
    %c0_54 = arith.constant 0 : index
    %82 = vector.load %arg6[%c577, %c0_54] : memref<584x32xf32, #tpu.memory_space<vmem>>, vector<1x32xf32>
    %83 = arith.addf %14, %70 : vector<2x32xf32>
    %84 = vector.extract_strided_slice %24 {offsets = [0, 0, 0], sizes = [1, 2, 32], strides = [1, 1, 1]} : vector<2x2x32xf32> to vector<1x2x32xf32>
    %85 = vector.shape_cast %84 : vector<1x2x32xf32> to vector<2x32xf32>
    %86 = arith.addf %83, %85 : vector<2x32xf32>
    %87 = vector.broadcast %82 : vector<1x32xf32> to vector<2x32xf32>
    %88 = arith.addf %86, %87 : vector<2x32xf32>
    %c578 = arith.constant 578 : index
    %c0_55 = arith.constant 0 : index
    %89 = vector.load %arg6[%c578, %c0_55] : memref<584x32xf32, #tpu.memory_space<vmem>>, vector<1x32xf32>
    %90 = arith.addf %16, %72 : vector<2x32xf32>
    %91 = vector.extract_strided_slice %27 {offsets = [0, 0, 0], sizes = [1, 2, 32], strides = [1, 1, 1]} : vector<2x2x32xf32> to vector<1x2x32xf32>
    %92 = vector.shape_cast %91 : vector<1x2x32xf32> to vector<2x32xf32>
    %93 = arith.addf %90, %92 : vector<2x32xf32>
    %94 = vector.broadcast %89 : vector<1x32xf32> to vector<2x32xf32>
    %95 = arith.addf %93, %94 : vector<2x32xf32>
    %c579 = arith.constant 579 : index
    %c0_56 = arith.constant 0 : index
    %96 = vector.load %arg6[%c579, %c0_56] : memref<584x32xf32, #tpu.memory_space<vmem>>, vector<1x32xf32>
    %97 = arith.addf %18, %74 : vector<2x32xf32>
    %98 = vector.extract_strided_slice %30 {offsets = [0, 0, 0], sizes = [1, 2, 32], strides = [1, 1, 1]} : vector<2x2x32xf32> to vector<1x2x32xf32>
    %99 = vector.shape_cast %98 : vector<1x2x32xf32> to vector<2x32xf32>
    %100 = arith.addf %97, %99 : vector<2x32xf32>
    %101 = vector.broadcast %96 : vector<1x32xf32> to vector<2x32xf32>
    %102 = arith.addf %100, %101 : vector<2x32xf32>
    %103 = arith.negf %81 : vector<2x32xf32>
    %104 = math.exp %103 : vector<2x32xf32>
    %cst_57 = arith.constant 1.000000e+00 : f32
    %105 = vector.broadcast %cst_57 : f32 to vector<2x32xf32>
    %106 = arith.addf %105, %104 : vector<2x32xf32>
    %107 = arith.divf %105, %106 : vector<2x32xf32>
    %108 = arith.negf %88 : vector<2x32xf32>
    %109 = math.exp %108 : vector<2x32xf32>
    %cst_58 = arith.constant 1.000000e+00 : f32
    %110 = vector.broadcast %cst_58 : f32 to vector<2x32xf32>
    %111 = arith.addf %110, %109 : vector<2x32xf32>
    %112 = arith.divf %110, %111 : vector<2x32xf32>
    %113 = math.tanh %95 : vector<2x32xf32>
    %114 = arith.negf %102 : vector<2x32xf32>
    %115 = math.exp %114 : vector<2x32xf32>
    %cst_59 = arith.constant 1.000000e+00 : f32
    %116 = vector.broadcast %cst_59 : f32 to vector<2x32xf32>
    %117 = arith.addf %116, %115 : vector<2x32xf32>
    %118 = arith.divf %116, %117 : vector<2x32xf32>
    %119 = vector.extract_strided_slice %1 {offsets = [0, 0, 0], sizes = [1, 2, 32], strides = [1, 1, 1]} : vector<2x2x32xf32> to vector<1x2x32xf32>
    %120 = vector.shape_cast %119 : vector<1x2x32xf32> to vector<2x32xf32>
    %121 = arith.mulf %112, %120 : vector<2x32xf32>
    %122 = arith.mulf %107, %113 : vector<2x32xf32>
    %123 = arith.addf %121, %122 : vector<2x32xf32>
    %124 = math.tanh %123 : vector<2x32xf32>
    %125 = arith.mulf %118, %124 : vector<2x32xf32>
    %c580 = arith.constant 580 : index
    %c0_60 = arith.constant 0 : index
    %126 = vector.load %arg6[%c580, %c0_60] : memref<584x32xf32, #tpu.memory_space<vmem>>, vector<1x32xf32>
    %c192 = arith.constant 192 : index
    %c0_61 = arith.constant 0 : index
    %127 = vector.load %arg6[%c192, %c0_61] : memref<584x32xf32, #tpu.memory_space<vmem>>, vector<32x32xf32>
    %cst_62 = arith.constant dense<0.000000e+00> : vector<2x32xf32>
    %128 = tpu.matmul %125, %127, %cst_62 {dimension_numbers = #tpu.dot_dimension_numbers<[1], [0], [0], [1], [0, 0, 1, 1], [], []>} : vector<2x32xf32>, vector<32x32xf32>, vector<2x32xf32> -> vector<2x32xf32>
    %129 = vector.extract_strided_slice %21 {offsets = [1, 0, 0], sizes = [1, 2, 32], strides = [1, 1, 1]} : vector<2x2x32xf32> to vector<1x2x32xf32>
    %130 = vector.shape_cast %129 : vector<1x2x32xf32> to vector<2x32xf32>
    %131 = arith.addf %128, %130 : vector<2x32xf32>
    %132 = vector.broadcast %126 : vector<1x32xf32> to vector<2x32xf32>
    %133 = arith.addf %131, %132 : vector<2x32xf32>
    %c581 = arith.constant 581 : index
    %c0_63 = arith.constant 0 : index
    %134 = vector.load %arg6[%c581, %c0_63] : memref<584x32xf32, #tpu.memory_space<vmem>>, vector<1x32xf32>
    %c224 = arith.constant 224 : index
    %c0_64 = arith.constant 0 : index
    %135 = vector.load %arg6[%c224, %c0_64] : memref<584x32xf32, #tpu.memory_space<vmem>>, vector<32x32xf32>
    %cst_65 = arith.constant dense<0.000000e+00> : vector<2x32xf32>
    %136 = tpu.matmul %125, %135, %cst_65 {dimension_numbers = #tpu.dot_dimension_numbers<[1], [0], [0], [1], [0, 0, 1, 1], [], []>} : vector<2x32xf32>, vector<32x32xf32>, vector<2x32xf32> -> vector<2x32xf32>
    %137 = vector.extract_strided_slice %24 {offsets = [1, 0, 0], sizes = [1, 2, 32], strides = [1, 1, 1]} : vector<2x2x32xf32> to vector<1x2x32xf32>
    %138 = vector.shape_cast %137 : vector<1x2x32xf32> to vector<2x32xf32>
    %139 = arith.addf %136, %138 : vector<2x32xf32>
    %140 = vector.broadcast %134 : vector<1x32xf32> to vector<2x32xf32>
    %141 = arith.addf %139, %140 : vector<2x32xf32>
    %c582 = arith.constant 582 : index
    %c0_66 = arith.constant 0 : index
    %142 = vector.load %arg6[%c582, %c0_66] : memref<584x32xf32, #tpu.memory_space<vmem>>, vector<1x32xf32>
    %c256 = arith.constant 256 : index
    %c0_67 = arith.constant 0 : index
    %143 = vector.load %arg6[%c256, %c0_67] : memref<584x32xf32, #tpu.memory_space<vmem>>, vector<32x32xf32>
    %cst_68 = arith.constant dense<0.000000e+00> : vector<2x32xf32>
    %144 = tpu.matmul %125, %143, %cst_68 {dimension_numbers = #tpu.dot_dimension_numbers<[1], [0], [0], [1], [0, 0, 1, 1], [], []>} : vector<2x32xf32>, vector<32x32xf32>, vector<2x32xf32> -> vector<2x32xf32>
    %145 = vector.extract_strided_slice %27 {offsets = [1, 0, 0], sizes = [1, 2, 32], strides = [1, 1, 1]} : vector<2x2x32xf32> to vector<1x2x32xf32>
    %146 = vector.shape_cast %145 : vector<1x2x32xf32> to vector<2x32xf32>
    %147 = arith.addf %144, %146 : vector<2x32xf32>
    %148 = vector.broadcast %142 : vector<1x32xf32> to vector<2x32xf32>
    %149 = arith.addf %147, %148 : vector<2x32xf32>
    %c583 = arith.constant 583 : index
    %c0_69 = arith.constant 0 : index
    %150 = vector.load %arg6[%c583, %c0_69] : memref<584x32xf32, #tpu.memory_space<vmem>>, vector<1x32xf32>
    %c288 = arith.constant 288 : index
    %c0_70 = arith.constant 0 : index
    %151 = vector.load %arg6[%c288, %c0_70] : memref<584x32xf32, #tpu.memory_space<vmem>>, vector<32x32xf32>
    %cst_71 = arith.constant dense<0.000000e+00> : vector<2x32xf32>
    %152 = tpu.matmul %125, %151, %cst_71 {dimension_numbers = #tpu.dot_dimension_numbers<[1], [0], [0], [1], [0, 0, 1, 1], [], []>} : vector<2x32xf32>, vector<32x32xf32>, vector<2x32xf32> -> vector<2x32xf32>
    %153 = vector.extract_strided_slice %30 {offsets = [1, 0, 0], sizes = [1, 2, 32], strides = [1, 1, 1]} : vector<2x2x32xf32> to vector<1x2x32xf32>
    %154 = vector.shape_cast %153 : vector<1x2x32xf32> to vector<2x32xf32>
    %155 = arith.addf %152, %154 : vector<2x32xf32>
    %156 = vector.broadcast %150 : vector<1x32xf32> to vector<2x32xf32>
    %157 = arith.addf %155, %156 : vector<2x32xf32>
    %158 = arith.negf %133 : vector<2x32xf32>
    %159 = math.exp %158 : vector<2x32xf32>
    %cst_72 = arith.constant 1.000000e+00 : f32
    %160 = vector.broadcast %cst_72 : f32 to vector<2x32xf32>
    %161 = arith.addf %160, %159 : vector<2x32xf32>
    %162 = arith.divf %160, %161 : vector<2x32xf32>
    %163 = arith.negf %141 : vector<2x32xf32>
    %164 = math.exp %163 : vector<2x32xf32>
    %cst_73 = arith.constant 1.000000e+00 : f32
    %165 = vector.broadcast %cst_73 : f32 to vector<2x32xf32>
    %166 = arith.addf %165, %164 : vector<2x32xf32>
    %167 = arith.divf %165, %166 : vector<2x32xf32>
    %168 = math.tanh %149 : vector<2x32xf32>
    %169 = arith.negf %157 : vector<2x32xf32>
    %170 = math.exp %169 : vector<2x32xf32>
    %cst_74 = arith.constant 1.000000e+00 : f32
    %171 = vector.broadcast %cst_74 : f32 to vector<2x32xf32>
    %172 = arith.addf %171, %170 : vector<2x32xf32>
    %173 = arith.divf %171, %172 : vector<2x32xf32>
    %174 = vector.extract_strided_slice %1 {offsets = [1, 0, 0], sizes = [1, 2, 32], strides = [1, 1, 1]} : vector<2x2x32xf32> to vector<1x2x32xf32>
    %175 = vector.shape_cast %174 : vector<1x2x32xf32> to vector<2x32xf32>
    %176 = arith.mulf %167, %175 : vector<2x32xf32>
    %177 = arith.mulf %162, %168 : vector<2x32xf32>
    %178 = arith.addf %176, %177 : vector<2x32xf32>
    %179 = math.tanh %178 : vector<2x32xf32>
    %180 = arith.mulf %173, %179 : vector<2x32xf32>
    %181 = vector.shape_cast %125 : vector<2x32xf32> to vector<1x2x32xf32>
    %182 = vector.shape_cast %180 : vector<2x32xf32> to vector<1x2x32xf32>
    %183 = tpu.concatenate %181, %182 in 0 : vector<1x2x32xf32>, vector<1x2x32xf32> -> vector<2x2x32xf32>
    %c0_75 = arith.constant 0 : index
    %c0_76 = arith.constant 0 : index
    %c0_77 = arith.constant 0 : index
    %184 = vector.load %arg9[%c0_75, %c0_76, %c0_77] : memref<2x2x32xf32, #tpu.memory_space<vmem>>, vector<2x2x32xf32>
    tpu.vector_store %arg9[%c0_75, %c0_76, %c0_77], %183 {strides = array<i32>} : memref<2x2x32xf32, #tpu.memory_space<vmem>>, vector<2x2x32xf32>,
    %185 = vector.shape_cast %123 : vector<2x32xf32> to vector<1x2x32xf32>
    %186 = vector.shape_cast %178 : vector<2x32xf32> to vector<1x2x32xf32>
    %187 = tpu.concatenate %185, %186 in 0 : vector<1x2x32xf32>, vector<1x2x32xf32> -> vector<2x2x32xf32>
    %c0_78 = arith.constant 0 : index
    %c0_79 = arith.constant 0 : index
    %c0_80 = arith.constant 0 : index
    %188 = vector.load %arg10[%c0_78, %c0_79, %c0_80] : memref<2x2x32xf32, #tpu.memory_space<vmem>>, vector<2x2x32xf32>
    tpu.vector_store %arg10[%c0_78, %c0_79, %c0_80], %187 {strides = array<i32>} : memref<2x2x32xf32, #tpu.memory_space<vmem>>, vector<2x2x32xf32>,
    %c0_81 = arith.constant 0 : index
    %c0_82 = arith.constant 0 : index
    %189 = vector.load %arg7[%c0_81, %c0_82] : memref<72x32xf32, #tpu.memory_space<vmem>>, vector<32x32xf32>
    %c64_83 = arith.constant 64 : index
    %c0_84 = arith.constant 0 : index
    %190 = vector.load %arg7[%c64_83, %c0_84] : memref<72x32xf32, #tpu.memory_space<vmem>>, vector<1x32xf32>
    %cst_85 = arith.constant dense<0.000000e+00> : vector<2x32xf32>
    %191 = tpu.matmul %180, %189, %cst_85 {dimension_numbers = #tpu.dot_dimension_numbers<[1], [0], [0], [1], [0, 0, 1, 1], [], []>} : vector<2x32xf32>, vector<32x32xf32>, vector<2x32xf32> -> vector<2x32xf32>
    %192 = arith.addf %191, %66 : vector<2x32xf32>
    %193 = vector.broadcast %190 : vector<1x32xf32> to vector<2x32xf32>
    %194 = arith.addf %192, %193 : vector<2x32xf32>
    %c0_86 = arith.constant 0 : index
    %c0_87 = arith.constant 0 : index
    %195 = vector.load %arg8[%c0_86, %c0_87] : memref<2x32xf32, #tpu.memory_space<vmem>>, vector<2x32xf32>
    tpu.vector_store %arg8[%c0_86, %c0_87], %194 {strides = array<i32>} : memref<2x32xf32, #tpu.memory_space<vmem>>, vector<2x32xf32>,
    return
  }
}

</mosaic_0001>

<llo_original>
// kernel: decoder_forward.1
$region0: #{decoder_forward.1}
  #allocation0 [shape = 'u32[]', space=smem, size = 0x4, offset = 0x4, fixed_abs, tag = 'smem constant byte address 0x4 - core index']
  #allocation1 [shape = 'u32[144,128]{1,0:T(1,128)}', space=vmem, size = 0x12000, scoped, tag = 'internal scratch']
  %s0 = inlined_call_operand.vmem [shape: s32[2,1], index: 0, kind: input, shape index: {}]
  %s1 = inlined_call_operand.vmem [shape: f32[32,16], index: 1, kind: input, shape index: {}]
  %s2 = inlined_call_operand.hbm [shape: f32[2,2,32], index: 2, kind: input, shape index: {}, may-alias: {2,9}]
  %s3 = inlined_call_operand.hbm [shape: f32[2,2,32], index: 3, kind: input, shape index: {}, may-alias: {3,10}]
  %s4 = inlined_call_operand.vmem [shape: f32[2,8,32], index: 4, kind: input, shape index: {}]
  %s5 = inlined_call_operand.vmem [shape: f32[80,32], index: 5, kind: input, shape index: {}]
  %s6 = inlined_call_operand.vmem [shape: f32[584,32], index: 6, kind: input, shape index: {}]
  %s7 = inlined_call_operand.vmem [shape: f32[72,32], index: 7, kind: input, shape index: {}]
  %s8 = inlined_call_operand.hbm [shape: f32[2,32], index: 8, kind: output, shape index: {0}]
  %s9 = inlined_call_operand.hbm [shape: f32[2,2,32], index: 9, kind: output, shape index: {1}, may-alias: {2,9}]
  %s10 = inlined_call_operand.hbm [shape: f32[2,2,32], index: 10, kind: output, shape index: {2}, may-alias: {3,10}]
  %11 = xla_tuple %s8, %s9, %s10
  %s12 = sld [smem:[#allocation0]]
  $region66: #{decoder_forward.1} parent=0
    _
  %s14 = ssub.s32 1, %s12
  %s15 = scalar_select 0, %s14, %s12
  $region1: #{decoder_forward.1} parent=0
    #allocation2 [shape = 'u8[2048]{0}', space=vmem, size = 0x800, scoped, tag = 'input window, operand 2, single buffered']
    #allocation3 [shape = 's32[1]{0}', space=sflag, size = 0x4, scoped, tag = 'scoped memory for decoder_forward.1']
    #allocation4 [shape = 's32[1]{0}', space=sflag, size = 0x4, scoped, tag = 'scoped memory for decoder_forward.1']
    #allocation5 [shape = 'u8[2048]{0}', space=vmem, size = 0x800, scoped, tag = 'input window, operand 3, single buffered']
    #allocation6 [shape = 's32[1]{0}', space=sflag, size = 0x4, scoped, tag = 'scoped memory for decoder_forward.1']
    #allocation7 [shape = 'u8[1024]{0}', space=vmem, size = 0x400, scoped, tag = 'output window, operand 0, single buffered']
    #allocation8 [shape = 'u8[2048]{0}', space=vmem, size = 0x800, scoped, tag = 'output window, operand 1, single buffered']
    #allocation9 [shape = 's32[1]{0}', space=sflag, size = 0x4, scoped, tag = 'scoped memory for decoder_forward.1']
    #allocation10 [shape = 'u8[2048]{0}', space=vmem, size = 0x800, scoped, tag = 'output window, operand 2, single buffered']
    %16 = vsyncpa [#allocation3], 0
    %17 = vsyncpa [#allocation6], 0
    %18 = vsyncpa [#allocation4], 0
    %19 = vsyncpa [#allocation9], 0
    // Predicated region
    $region2: #{decoder_forward.1} parent=1 // pred_check
      _
    $region3: #{decoder_forward.1} parent=1 // pred_check_branch
      %21 = sbr.rel (0) target = $region5
    $region4: #{decoder_forward.1} parent=1 // pred_region
      _
    $region5: #{decoder_forward.1} parent=1 // pred_fallthru
      _
    // Predicated region
    $region6: #{decoder_forward.1} parent=1 // pred_check
      _
    $region7: #{decoder_forward.1} parent=1 // pred_check_branch
      %23 = sbr.rel (0) target = $region9
    $region8: #{decoder_forward.1} parent=1 // pred_region
      _
    $region9: #{decoder_forward.1} parent=1 // pred_fallthru
      _
    // Predicated region
    $region10: #{decoder_forward.1} parent=1 // pred_check
      _
    $region11: #{decoder_forward.1} parent=1 // pred_check_branch
      %25 = sbr.rel (0) target = $region13
    $region12: #{decoder_forward.1} parent=1 // pred_region
      %s27 = ssub.s32 64, 64
      %28 = vsyncadd [#allocation3], %s27
      %s29 = sshll.u32 [#allocation2], 4
      %s30 = int_to_ptr.vmem [resolvable:$true] %s29
      %35 = dma.hbm_to_vmem [thread:$0]  %s2, 64, %s30, [#allocation3], 32, 32, 2
    $region13: #{decoder_forward.1} parent=1 // pred_fallthru
      _
    // Predicated region
    $region14: #{decoder_forward.1} parent=1 // pred_check
      _
    $region15: #{decoder_forward.1} parent=1 // pred_check_branch
      %37 = sbr.rel (0) target = $region17
    $region16: #{decoder_forward.1} parent=1 // pred_region
      %s39 = ssub.s32 64, 64
      %40 = vsyncadd [#allocation6], %s39
      %s41 = sshll.u32 [#allocation5], 4
      %s42 = int_to_ptr.vmem [resolvable:$true] %s41
      %47 = dma.hbm_to_vmem [thread:$0]  %s3, 64, %s42, [#allocation6], 32, 32, 2
    $region17: #{decoder_forward.1} parent=1 // pred_fallthru
      _
    // Predicated region
    $region18: #{decoder_forward.1} parent=1 // pred_check
      _
    $region19: #{decoder_forward.1} parent=1 // pred_check_branch
      %49 = sbr.rel (0) target = $region21
    $region20: #{decoder_forward.1} parent=1 // pred_region
      _
    $region21: #{decoder_forward.1} parent=1 // pred_fallthru
      _
    // Predicated region
    $region22: #{decoder_forward.1} parent=1 // pred_check
      _
    $region23: #{decoder_forward.1} parent=1 // pred_check_branch
      %51 = sbr.rel (0) target = $region25
    $region24: #{decoder_forward.1} parent=1 // pred_region
      _
    $region25: #{decoder_forward.1} parent=1 // pred_fallthru
      _
    // Predicated region
    $region26: #{decoder_forward.1} parent=1 // pred_check
      _
    $region27: #{decoder_forward.1} parent=1 // pred_check_branch
      %53 = sbr.rel (0) target = $region29
    $region28: #{decoder_forward.1} parent=1 // pred_region
      _
    $region29: #{decoder_forward.1} parent=1 // pred_fallthru
      _
    // Predicated region
    $region30: #{decoder_forward.1} parent=1 // pred_check
      _
    $region31: #{decoder_forward.1} parent=1 // pred_check_branch
      %55 = sbr.rel (0) target = $region33
    $region32: #{decoder_forward.1} parent=1 // pred_region
      _
    $region33: #{decoder_forward.1} parent=1 // pred_fallthru
      _
    // Predicated region
    $region34: #{decoder_forward.1} parent=1 // pred_check
      _
    $region35: #{decoder_forward.1} parent=1 // pred_check_branch
      %57 = sbr.rel (0) target = $region37
    $region36: #{decoder_forward.1} parent=1 // pred_region
      %58 = dma.done [#allocation3], 64
    $region37: #{decoder_forward.1} parent=1 // pred_fallthru
      _
    // Predicated region
    $region38: #{decoder_forward.1} parent=1 // pred_check
      _
    $region39: #{decoder_forward.1} parent=1 // pred_check_branch
      %60 = sbr.rel (0) target = $region41
    $region40: #{decoder_forward.1} parent=1 // pred_region
      %61 = dma.done [#allocation6], 64
    $region41: #{decoder_forward.1} parent=1 // pred_fallthru
      _
    %v62 = vld [vmem:[#allocation2] sm:$0x3]
    %v63 = vld [vmem:[#allocation2 + $0x2] sm:$0x3]
    %v64 = vld [vmem:[#allocation5] sm:$0x3]
    %v65 = vld [vmem:[#allocation5 + $0x2] sm:$0x3]
    %v66 = vld [vmem:[%s4] sm:$0xff]
    %v67 = vld [vmem:[%s4 + $0x8] sm:$0xff]
    %v68 = vld [vmem:[%s0] sm:$0x3]
    %v69 = vlaneseq
    %v70 = vand.u32 %v69, 127
    %71 = vset.pattern.permute.xlu0 0
    %72 = vperm.xlu0 %71, %v68
    %v73 = vpop.permute.xlu0 %72
    %vm74 = vcmp.eq.s32.totalorder %v70, %v73
    %v75 = vsel %vm74, 1, 0
    %v76 = vcvt.s32.f32 %v75
    %v77 = vld [vmem:[%s1] sm:$0xff]
    %v78 = vld [vmem:[%s1 + $0x8] sm:$0xff]
    %v79 = vld [vmem:[%s1 + $0x10] sm:$0xff]
    %v80 = vld [vmem:[%s1 + $0x18] sm:$0xff]
    %vm81 = vcmask 261120
    %v83 = vsel %vm81, %v76, 0
    %85 = vmatprep.subr.mxu0 0.0
    %86 = vmatpush1.msra.mxu0 %v77
    %87 = vmatprep.subr.mxu0 0.0
    %88 = vmatpush1.msra.mxu0 %v78
    %89 = vmatprep.subr.mxu0 0.0
    %90 = vmatpush1.msra.mxu0 %v79
    %91 = vmatprep.subr.mxu0 0.0
    %92 = vmatpush1.msra.mxu0 %v80
    %93 = vmatprep.subr.mxu0 0.0
    %94 = vmatpush1.msra.mxu0 0.0
    %95 = vmatprep.subr.mxu0 0.0
    %96 = vmatpush1.msra.mxu0 0.0
    %97 = vmatprep.subr.mxu0 0.0
    %98 = vmatpush1.msra.mxu0 0.0
    %99 = vmatprep.subr.mxu0 0.0
    %100 = vmatpush1.msra.mxu0 0.0
    %101 = vmatprep.subr.mxu0 0.0
    %102 = vmatpush1.msra.mxu0 0.0
    %103 = vmatprep.subr.mxu0 0.0
    %104 = vmatpush1.msra.mxu0 0.0
    %105 = vmatprep.subr.mxu0 0.0
    %106 = vmatpush1.msra.mxu0 0.0
    %107 = vmatprep.subr.mxu0 0.0
    %108 = vmatpush1.msra.mxu0 0.0
    %109 = vmatprep.subr.mxu0 0.0
    %110 = vmatpush1.msra.mxu0 0.0
    %111 = vmatprep.subr.mxu0 0.0
    %112 = vmatpush1.msra.mxu0 0.0
    %113 = vmatprep.subr.mxu0 0.0
    %114 = vmatpush1.msra.mxu0 0.0
    %115 = vmatprep.subr.mxu0 0.0
    %116 = vmatpush1.msra.mxu0 0.0
    %117 = vmatprep.subr.mxu0 0.0
    %118 = vmatpush1.msra.mxu0 0.0
    %119 = vmatprep.subr.mxu0 0.0
    %120 = vmatpush1.msra.mxu0 0.0
    %121 = vmatprep.subr.mxu0 0.0
    %122 = vmatpush1.msra.mxu0 0.0
    %123 = vmatprep.subr.mxu0 0.0
    %124 = vmatpush1.msra.mxu0 0.0
    %125 = vmatprep.subr.mxu0 0.0
    %126 = vmatpush1.msra.mxu0 0.0
    %127 = vmatprep.subr.mxu0 0.0
    %128 = vmatpush1.msra.mxu0 0.0
    %129 = vmatprep.subr.mxu0 0.0
    %130 = vmatpush1.msra.mxu0 0.0
    %131 = vmatprep.subr.mxu0 0.0
    %132 = vmatpush1.msra.mxu0 0.0
    %133 = vmatprep.subr.mxu0 0.0
    %134 = vmatpush1.msra.mxu0 0.0
    %135 = vmatprep.subr.mxu0 0.0
    %136 = vmatpush1.msra.mxu0 0.0
    %137 = vmatprep.subr.mxu0 0.0
    %138 = vmatpush1.msra.mxu0 0.0
    %139 = vmatprep.subr.mxu0 0.0
    %140 = vmatpush1.msra.mxu0 0.0
    %141 = vmatprep.subr.mxu0 0.0
    %142 = vmatpush1.msra.mxu0 0.0
    %143 = vmatprep.subr.mxu0 0.0
    %144 = vmatpush1.msra.mxu0 0.0
    %145 = vmatprep.subr.mxu0 0.0
    %146 = vmatpush1.msra.mxu0 0.0
    %147 = vmatprep.subr.mxu0 0.0
    %148 = vmatpush1.msra.mxu0 0.0
    %149 = vmatprep.mubr.f32.mxu0 0.0
    %150 = vmatmul.mubr.f32.gmra.mrb[0].mxu0 %v83
    %v151 = vpop.f32.mrb[0].mxu0
    %v152 = vadd.f32 0.0, %v151
    %v153 = vpop.f32.mrb[0].mxu0
    %154 = vdwg.mxu0
    %v155 = vld [vmem:[%s6] sm:$0xff]
    %v156 = vld [vmem:[%s6 + $0x8] sm:$0xff]
    %v157 = vld [vmem:[%s6 + $0x10] sm:$0xff]
    %v158 = vld [vmem:[%s6 + $0x18] sm:$0xff]
    %v159 = vld [vmem:[%s6 + $0x20] sm:$0xff]
    %v160 = vld [vmem:[%s6 + $0x28] sm:$0xff]
    %v161 = vld [vmem:[%s6 + $0x30] sm:$0xff]
    %v162 = vld [vmem:[%s6 + $0x38] sm:$0xff]
    %v163 = vld [vmem:[%s6 + $0x140] sm:$0xff]
    %v164 = vld [vmem:[%s6 + $0x148] sm:$0xff]
    %v165 = vld [vmem:[%s6 + $0x150] sm:$0xff]
    %v166 = vld [vmem:[%s6 + $0x158] sm:$0xff]
    %v167 = vld [vmem:[%s6 + $0x160] sm:$0xff]
    %v168 = vld [vmem:[%s6 + $0x168] sm:$0xff]
    %v169 = vld [vmem:[%s6 + $0x170] sm:$0xff]
    %v170 = vld [vmem:[%s6 + $0x178] sm:$0xff]
    %v172 = vsel %vm81, %v62, 0
    %174 = vmatprep.subr.mxu0 0.0
    %175 = vmatpush1.msra.mxu0 %v163
    %176 = vmatprep.subr.mxu0 0.0
    %177 = vmatpush1.msra.mxu0 %v164
    %178 = vmatprep.subr.mxu0 0.0
    %179 = vmatpush1.msra.mxu0 %v165
    %180 = vmatprep.subr.mxu0 0.0
    %181 = vmatpush1.msra.mxu0 %v166
    %182 = vmatprep.subr.mxu0 0.0
    %183 = vmatpush1.msra.mxu0 0.0
    %184 = vmatprep.subr.mxu0 0.0
    %185 = vmatpush1.msra.mxu0 0.0
    %186 = vmatprep.subr.mxu0 0.0
    %187 = vmatpush1.msra.mxu0 0.0
    %188 = vmatprep.subr.mxu0 0.0
    %189 = vmatpush1.msra.mxu0 0.0
    %190 = vmatprep.subr.mxu0 0.0
    %191 = vmatpush1.msra.mxu0 0.0
    %192 = vmatprep.subr.mxu0 0.0
    %193 = vmatpush1.msra.mxu0 0.0
    %194 = vmatprep.subr.mxu0 0.0
    %195 = vmatpush1.msra.mxu0 0.0
    %196 = vmatprep.subr.mxu0 0.0
    %197 = vmatpush1.msra.mxu0 0.0
    %198 = vmatprep.subr.mxu0 0.0
    %199 = vmatpush1.msra.mxu0 0.0
    %200 = vmatprep.subr.mxu0 0.0
    %201 = vmatpush1.msra.mxu0 0.0
    %202 = vmatprep.subr.mxu0 0.0
    %203 = vmatpush1.msra.mxu0 0.0
    %204 = vmatprep.subr.mxu0 0.0
    %205 = vmatpush1.msra.mxu0 0.0
    %206 = vmatprep.subr.mxu0 0.0
    %207 = vmatpush1.msra.mxu0 0.0
    %208 = vmatprep.subr.mxu0 0.0
    %209 = vmatpush1.msra.mxu0 0.0
    %210 = vmatprep.subr.mxu0 0.0
    %211 = vmatpush1.msra.mxu0 0.0
    %212 = vmatprep.subr.mxu0 0.0
    %213 = vmatpush1.msra.mxu0 0.0
    %214 = vmatprep.subr.mxu0 0.0
    %215 = vmatpush1.msra.mxu0 0.0
    %216 = vmatprep.subr.mxu0 0.0
    %217 = vmatpush1.msra.mxu0 0.0
    %218 = vmatprep.subr.mxu0 0.0
    %219 = vmatpush1.msra.mxu0 0.0
    %220 = vmatprep.subr.mxu0 0.0
    %221 = vmatpush1.msra.mxu0 0.0
    %222 = vmatprep.subr.mxu0 0.0
    %223 = vmatpush1.msra.mxu0 0.0
    %224 = vmatprep.subr.mxu0 0.0
    %225 = vmatpush1.msra.mxu0 0.0
    %226 = vmatprep.subr.mxu0 0.0
    %227 = vmatpush1.msra.mxu0 0.0
    %228 = vmatprep.subr.mxu0 0.0
    %229 = vmatpush1.msra.mxu0 0.0
    %230 = vmatprep.subr.mxu0 0.0
    %231 = vmatpush1.msra.mxu0 0.0
    %232 = vmatprep.subr.mxu0 0.0
    %233 = vmatpush1.msra.mxu0 0.0
    %234 = vmatprep.subr.mxu0 0.0
    %235 = vmatpush1.msra.mxu0 0.0
    %236 = vmatprep.subr.mxu0 0.0
    %237 = vmatpush1.msra.mxu0 0.0
    %238 = vmatprep.mubr.f32.mxu0 0.0
    %239 = vmatmul.mubr.f32.gmra.mrb[0].mxu0 %v172
    %v240 = vpop.f32.mrb[0].mxu0
    %v241 = vadd.f32 0.0, %v240
    %v242 = vpop.f32.mrb[0].mxu0
    %243 = vdwg.mxu0
    %v245 = vsel %vm81, %v63, 0
    %247 = vmatprep.subr.mxu0 0.0
    %248 = vmatpush1.msra.mxu0 %v167
    %249 = vmatprep.subr.mxu0 0.0
    %250 = vmatpush1.msra.mxu0 %v168
    %251 = vmatprep.subr.mxu0 0.0
    %252 = vmatpush1.msra.mxu0 %v169
    %253 = vmatprep.subr.mxu0 0.0
    %254 = vmatpush1.msra.mxu0 %v170
    %255 = vmatprep.subr.mxu0 0.0
    %256 = vmatpush1.msra.mxu0 0.0
    %257 = vmatprep.subr.mxu0 0.0
    %258 = vmatpush1.msra.mxu0 0.0
    %259 = vmatprep.subr.mxu0 0.0
    %260 = vmatpush1.msra.mxu0 0.0
    %261 = vmatprep.subr.mxu0 0.0
    %262 = vmatpush1.msra.mxu0 0.0
    %263 = vmatprep.subr.mxu0 0.0
    %264 = vmatpush1.msra.mxu0 0.0
    %265 = vmatprep.subr.mxu0 0.0
    %266 = vmatpush1.msra.mxu0 0.0
    %267 = vmatprep.subr.mxu0 0.0
    %268 = vmatpush1.msra.mxu0 0.0
    %269 = vmatprep.subr.mxu0 0.0
    %270 = vmatpush1.msra.mxu0 0.0
    %271 = vmatprep.subr.mxu0 0.0
    %272 = vmatpush1.msra.mxu0 0.0
    %273 = vmatprep.subr.mxu0 0.0
    %274 = vmatpush1.msra.mxu0 0.0
    %275 = vmatprep.subr.mxu0 0.0
    %276 = vmatpush1.msra.mxu0 0.0
    %277 = vmatprep.subr.mxu0 0.0
    %278 = vmatpush1.msra.mxu0 0.0
    %279 = vmatprep.subr.mxu0 0.0
    %280 = vmatpush1.msra.mxu0 0.0
    %281 = vmatprep.subr.mxu0 0.0
    %282 = vmatpush1.msra.mxu0 0.0
    %283 = vmatprep.subr.mxu0 0.0
    %284 = vmatpush1.msra.mxu0 0.0
    %285 = vmatprep.subr.mxu0 0.0
    %286 = vmatpush1.msra.mxu0 0.0
    %287 = vmatprep.subr.mxu0 0.0
    %288 = vmatpush1.msra.mxu0 0.0
    %289 = vmatprep.subr.mxu0 0.0
    %290 = vmatpush1.msra.mxu0 0.0
    %291 = vmatprep.subr.mxu0 0.0
    %292 = vmatpush1.msra.mxu0 0.0
    %293 = vmatprep.subr.mxu0 0.0
    %294 = vmatpush1.msra.mxu0 0.0
    %295 = vmatprep.subr.mxu0 0.0
    %296 = vmatpush1.msra.mxu0 0.0
    %297 = vmatprep.subr.mxu0 0.0
    %298 = vmatpush1.msra.mxu0 0.0
    %299 = vmatprep.subr.mxu0 0.0
    %300 = vmatpush1.msra.mxu0 0.0
    %301 = vmatprep.subr.mxu0 0.0
    %302 = vmatpush1.msra.mxu0 0.0
    %303 = vmatprep.subr.mxu0 0.0
    %304 = vmatpush1.msra.mxu0 0.0
    %305 = vmatprep.subr.mxu0 0.0
    %306 = vmatpush1.msra.mxu0 0.0
    %307 = vmatprep.subr.mxu0 0.0
    %308 = vmatpush1.msra.mxu0 0.0
    %309 = vmatprep.subr.mxu0 0.0
    %310 = vmatpush1.msra.mxu0 0.0
    %311 = vmatprep.mubr.f32.mxu0 0.0
    %312 = vmatmul.mubr.f32.gmra.mrb[0].mxu0 %v245
    %v313 = vpop.f32.mrb[0].mxu0
    %v314 = vadd.f32 0.0, %v313
    %v315 = vpop.f32.mrb[0].mxu0
    %316 = vdwg.mxu0
    %v317 = vld [vmem:[%s6 + $0x180] sm:$0xff]
    %v318 = vld [vmem:[%s6 + $0x188] sm:$0xff]
    %v319 = vld [vmem:[%s6 + $0x190] sm:$0xff]
    %v320 = vld [vmem:[%s6 + $0x198] sm:$0xff]
    %v321 = vld [vmem:[%s6 + $0x1a0] sm:$0xff]
    %v322 = vld [vmem:[%s6 + $0x1a8] sm:$0xff]
    %v323 = vld [vmem:[%s6 + $0x1b0] sm:$0xff]
    %v324 = vld [vmem:[%s6 + $0x1b8] sm:$0xff]
    %325 = vmatprep.subr.mxu0 0.0
    %326 = vmatpush1.msra.mxu0 %v317
    %327 = vmatprep.subr.mxu0 0.0
    %328 = vmatpush1.msra.mxu0 %v318
    %329 = vmatprep.subr.mxu0 0.0
    %330 = vmatpush1.msra.mxu0 %v319
    %331 = vmatprep.subr.mxu0 0.0
    %332 = vmatpush1.msra.mxu0 %v320
    %333 = vmatprep.subr.mxu0 0.0
    %334 = vmatpush1.msra.mxu0 0.0
    %335 = vmatprep.subr.mxu0 0.0
    %336 = vmatpush1.msra.mxu0 0.0
    %337 = vmatprep.subr.mxu0 0.0
    %338 = vmatpush1.msra.mxu0 0.0
    %339 = vmatprep.subr.mxu0 0.0
    %340 = vmatpush1.msra.mxu0 0.0
    %341 = vmatprep.subr.mxu0 0.0
    %342 = vmatpush1.msra.mxu0 0.0
    %343 = vmatprep.subr.mxu0 0.0
    %344 = vmatpush1.msra.mxu0 0.0
    %345 = vmatprep.subr.mxu0 0.0
    %346 = vmatpush1.msra.mxu0 0.0
    %347 = vmatprep.subr.mxu0 0.0
    %348 = vmatpush1.msra.mxu0 0.0
    %349 = vmatprep.subr.mxu0 0.0
    %350 = vmatpush1.msra.mxu0 0.0
    %351 = vmatprep.subr.mxu0 0.0
    %352 = vmatpush1.msra.mxu0 0.0
    %353 = vmatprep.subr.mxu0 0.0
    %354 = vmatpush1.msra.mxu0 0.0
    %355 = vmatprep.subr.mxu0 0.0
    %356 = vmatpush1.msra.mxu0 0.0
    %357 = vmatprep.subr.mxu0 0.0
    %358 = vmatpush1.msra.mxu0 0.0
    %359 = vmatprep.subr.mxu0 0.0
    %360 = vmatpush1.msra.mxu0 0.0
    %361 = vmatprep.subr.mxu0 0.0
    %362 = vmatpush1.msra.mxu0 0.0
    %363 = vmatprep.subr.mxu0 0.0
    %364 = vmatpush1.msra.mxu0 0.0
    %365 = vmatprep.subr.mxu0 0.0
    %366 = vmatpush1.msra.mxu0 0.0
    %367 = vmatprep.subr.mxu0 0.0
    %368 = vmatpush1.msra.mxu0 0.0
    %369 = vmatprep.subr.mxu0 0.0
    %370 = vmatpush1.msra.mxu0 0.0
    %371 = vmatprep.subr.mxu0 0.0
    %372 = vmatpush1.msra.mxu0 0.0
    %373 = vmatprep.subr.mxu0 0.0
    %374 = vmatpush1.msra.mxu0 0.0
    %375 = vmatprep.subr.mxu0 0.0
    %376 = vmatpush1.msra.mxu0 0.0
    %377 = vmatprep.subr.mxu0 0.0
    %378 = vmatpush1.msra.mxu0 0.0
    %379 = vmatprep.subr.mxu0 0.0
    %380 = vmatpush1.msra.mxu0 0.0
    %381 = vmatprep.subr.mxu0 0.0
    %382 = vmatpush1.msra.mxu0 0.0
    %383 = vmatprep.subr.mxu0 0.0
    %384 = vmatpush1.msra.mxu0 0.0
    %385 = vmatprep.subr.mxu0 0.0
    %386 = vmatpush1.msra.mxu0 0.0
    %387 = vmatprep.subr.mxu0 0.0
    %388 = vmatpush1.msra.mxu0 0.0
    %389 = vmatprep.mubr.f32.mxu0 0.0
    %390 = vmatmul.mubr.f32.gmra.mrb[0].mxu0 %v172
    %v391 = vpop.f32.mrb[0].mxu0
    %v392 = vadd.f32 0.0, %v391
    %v393 = vpop.f32.mrb[0].mxu0
    %394 = vdwg.mxu0
    %395 = vmatprep.subr.mxu0 0.0
    %396 = vmatpush1.msra.mxu0 %v321
    %397 = vmatprep.subr.mxu0 0.0
    %398 = vmatpush1.msra.mxu0 %v322
    %399 = vmatprep.subr.mxu0 0.0
    %400 = vmatpush1.msra.mxu0 %v323
    %401 = vmatprep.subr.mxu0 0.0
    %402 = vmatpush1.msra.mxu0 %v324
    %403 = vmatprep.subr.mxu0 0.0
    %404 = vmatpush1.msra.mxu0 0.0
    %405 = vmatprep.subr.mxu0 0.0
    %406 = vmatpush1.msra.mxu0 0.0
    %407 = vmatprep.subr.mxu0 0.0
    %408 = vmatpush1.msra.mxu0 0.0
    %409 = vmatprep.subr.mxu0 0.0
    %410 = vmatpush1.msra.mxu0 0.0
    %411 = vmatprep.subr.mxu0 0.0
    %412 = vmatpush1.msra.mxu0 0.0
    %413 = vmatprep.subr.mxu0 0.0
    %414 = vmatpush1.msra.mxu0 0.0
    %415 = vmatprep.subr.mxu0 0.0
    %416 = vmatpush1.msra.mxu0 0.0
    %417 = vmatprep.subr.mxu0 0.0
    %418 = vmatpush1.msra.mxu0 0.0
    %419 = vmatprep.subr.mxu0 0.0
    %420 = vmatpush1.msra.mxu0 0.0
    %421 = vmatprep.subr.mxu0 0.0
    %422 = vmatpush1.msra.mxu0 0.0
    %423 = vmatprep.subr.mxu0 0.0
    %424 = vmatpush1.msra.mxu0 0.0
    %425 = vmatprep.subr.mxu0 0.0
    %426 = vmatpush1.msra.mxu0 0.0
    %427 = vmatprep.subr.mxu0 0.0
    %428 = vmatpush1.msra.mxu0 0.0
    %429 = vmatprep.subr.mxu0 0.0
    %430 = vmatpush1.msra.mxu0 0.0
    %431 = vmatprep.subr.mxu0 0.0
    %432 = vmatpush1.msra.mxu0 0.0
    %433 = vmatprep.subr.mxu0 0.0
    %434 = vmatpush1.msra.mxu0 0.0
    %435 = vmatprep.subr.mxu0 0.0
    %436 = vmatpush1.msra.mxu0 0.0
    %437 = vmatprep.subr.mxu0 0.0
    %438 = vmatpush1.msra.mxu0 0.0
    %439 = vmatprep.subr.mxu0 0.0
    %440 = vmatpush1.msra.mxu0 0.0
    %441 = vmatprep.subr.mxu0 0.0
    %442 = vmatpush1.msra.mxu0 0.0
    %443 = vmatprep.subr.mxu0 0.0
    %444 = vmatpush1.msra.mxu0 0.0
    %445 = vmatprep.subr.mxu0 0.0
    %446 = vmatpush1.msra.mxu0 0.0
    %447 = vmatprep.subr.mxu0 0.0
    %448 = vmatpush1.msra.mxu0 0.0
    %449 = vmatprep.subr.mxu0 0.0
    %450 = vmatpush1.msra.mxu0 0.0
    %451 = vmatprep.subr.mxu0 0.0
    %452 = vmatpush1.msra.mxu0 0.0
    %453 = vmatprep.subr.mxu0 0.0
    %454 = vmatpush1.msra.mxu0 0.0
    %455 = vmatprep.subr.mxu0 0.0
    %456 = vmatpush1.msra.mxu0 0.0
    %457 = vmatprep.subr.mxu0 0.0
    %458 = vmatpush1.msra.mxu0 0.0
    %459 = vmatprep.mubr.f32.mxu0 0.0
    %460 = vmatmul.mubr.f32.gmra.mrb[0].mxu0 %v245
    %v461 = vpop.f32.mrb[0].mxu0
    %v462 = vadd.f32 0.0, %v461
    %v463 = vpop.f32.mrb[0].mxu0
    %464 = vdwg.mxu0
    %v465 = vld [vmem:[%s6 + $0x1c0] sm:$0xff]
    %v466 = vld [vmem:[%s6 + $0x1c8] sm:$0xff]
    %v467 = vld [vmem:[%s6 + $0x1d0] sm:$0xff]
    %v468 = vld [vmem:[%s6 + $0x1d8] sm:$0xff]
    %v469 = vld [vmem:[%s6 + $0x1e0] sm:$0xff]
    %v470 = vld [vmem:[%s6 + $0x1e8] sm:$0xff]
    %v471 = vld [vmem:[%s6 + $0x1f0] sm:$0xff]
    %v472 = vld [vmem:[%s6 + $0x1f8] sm:$0xff]
    %473 = vmatprep.subr.mxu0 0.0
    %474 = vmatpush1.msra.mxu0 %v465
    %475 = vmatprep.subr.mxu0 0.0
    %476 = vmatpush1.msra.mxu0 %v466
    %477 = vmatprep.subr.mxu0 0.0
    %478 = vmatpush1.msra.mxu0 %v467
    %479 = vmatprep.subr.mxu0 0.0
    %480 = vmatpush1.msra.mxu0 %v468
    %481 = vmatprep.subr.mxu0 0.0
    %482 = vmatpush1.msra.mxu0 0.0
    %483 = vmatprep.subr.mxu0 0.0
    %484 = vmatpush1.msra.mxu0 0.0
    %485 = vmatprep.subr.mxu0 0.0
    %486 = vmatpush1.msra.mxu0 0.0
    %487 = vmatprep.subr.mxu0 0.0
    %488 = vmatpush1.msra.mxu0 0.0
    %489 = vmatprep.subr.mxu0 0.0
    %490 = vmatpush1.msra.mxu0 0.0
    %491 = vmatprep.subr.mxu0 0.0
    %492 = vmatpush1.msra.mxu0 0.0
    %493 = vmatprep.subr.mxu0 0.0
    %494 = vmatpush1.msra.mxu0 0.0
    %495 = vmatprep.subr.mxu0 0.0
    %496 = vmatpush1.msra.mxu0 0.0
    %497 = vmatprep.subr.mxu0 0.0
    %498 = vmatpush1.msra.mxu0 0.0
    %499 = vmatprep.subr.mxu0 0.0
    %500 = vmatpush1.msra.mxu0 0.0
    %501 = vmatprep.subr.mxu0 0.0
    %502 = vmatpush1.msra.mxu0 0.0
    %503 = vmatprep.subr.mxu0 0.0
    %504 = vmatpush1.msra.mxu0 0.0
    %505 = vmatprep.subr.mxu0 0.0
    %506 = vmatpush1.msra.mxu0 0.0
    %507 = vmatprep.subr.mxu0 0.0
    %508 = vmatpush1.msra.mxu0 0.0
    %509 = vmatprep.subr.mxu0 0.0
    %510 = vmatpush1.msra.mxu0 0.0
    %511 = vmatprep.subr.mxu0 0.0
    %512 = vmatpush1.msra.mxu0 0.0
    %513 = vmatprep.subr.mxu0 0.0
    %514 = vmatpush1.msra.mxu0 0.0
    %515 = vmatprep.subr.mxu0 0.0
    %516 = vmatpush1.msra.mxu0 0.0
    %517 = vmatprep.subr.mxu0 0.0
    %518 = vmatpush1.msra.mxu0 0.0
    %519 = vmatprep.subr.mxu0 0.0
    %520 = vmatpush1.msra.mxu0 0.0
    %521 = vmatprep.subr.mxu0 0.0
    %522 = vmatpush1.msra.mxu0 0.0
    %523 = vmatprep.subr.mxu0 0.0
    %524 = vmatpush1.msra.mxu0 0.0
    %525 = vmatprep.subr.mxu0 0.0
    %526 = vmatpush1.msra.mxu0 0.0
    %527 = vmatprep.subr.mxu0 0.0
    %528 = vmatpush1.msra.mxu0 0.0
    %529 = vmatprep.subr.mxu0 0.0
    %530 = vmatpush1.msra.mxu0 0.0
    %531 = vmatprep.subr.mxu0 0.0
    %532 = vmatpush1.msra.mxu0 0.0
    %533 = vmatprep.subr.mxu0 0.0
    %534 = vmatpush1.msra.mxu0 0.0
    %535 = vmatprep.subr.mxu0 0.0
    %536 = vmatpush1.msra.mxu0 0.0
    %537 = vmatprep.mubr.f32.mxu0 0.0
    %538 = vmatmul.mubr.f32.gmra.mrb[0].mxu0 %v172
    %v539 = vpop.f32.mrb[0].mxu0
    %v540 = vadd.f32 0.0, %v539
    %v541 = vpop.f32.mrb[0].mxu0
    %542 = vdwg.mxu0
    %543 = vmatprep.subr.mxu0 0.0
    %544 = vmatpush1.msra.mxu0 %v469
    %545 = vmatprep.subr.mxu0 0.0
    %546 = vmatpush1.msra.mxu0 %v470
    %547 = vmatprep.subr.mxu0 0.0
    %548 = vmatpush1.msra.mxu0 %v471
    %549 = vmatprep.subr.mxu0 0.0
    %550 = vmatpush1.msra.mxu0 %v472
    %551 = vmatprep.subr.mxu0 0.0
    %552 = vmatpush1.msra.mxu0 0.0
    %553 = vmatprep.subr.mxu0 0.0
    %554 = vmatpush1.msra.mxu0 0.0
    %555 = vmatprep.subr.mxu0 0.0
    %556 = vmatpush1.msra.mxu0 0.0
    %557 = vmatprep.subr.mxu0 0.0
    %558 = vmatpush1.msra.mxu0 0.0
    %559 = vmatprep.subr.mxu0 0.0
    %560 = vmatpush1.msra.mxu0 0.0
    %561 = vmatprep.subr.mxu0 0.0
    %562 = vmatpush1.msra.mxu0 0.0
    %563 = vmatprep.subr.mxu0 0.0
    %564 = vmatpush1.msra.mxu0 0.0
    %565 = vmatprep.subr.mxu0 0.0
    %566 = vmatpush1.msra.mxu0 0.0
    %567 = vmatprep.subr.mxu0 0.0
    %568 = vmatpush1.msra.mxu0 0.0
    %569 = vmatprep.subr.mxu0 0.0
    %570 = vmatpush1.msra.mxu0 0.0
    %571 = vmatprep.subr.mxu0 0.0
    %572 = vmatpush1.msra.mxu0 0.0
    %573 = vmatprep.subr.mxu0 0.0
    %574 = vmatpush1.msra.mxu0 0.0
    %575 = vmatprep.subr.mxu0 0.0
    %576 = vmatpush1.msra.mxu0 0.0
    %577 = vmatprep.subr.mxu0 0.0
    %578 = vmatpush1.msra.mxu0 0.0
    %579 = vmatprep.subr.mxu0 0.0
    %580 = vmatpush1.msra.mxu0 0.0
    %581 = vmatprep.subr.mxu0 0.0
    %582 = vmatpush1.msra.mxu0 0.0
    %583 = vmatprep.subr.mxu0 0.0
    %584 = vmatpush1.msra.mxu0 0.0
    %585 = vmatprep.subr.mxu0 0.0
    %586 = vmatpush1.msra.mxu0 0.0
    %587 = vmatprep.subr.mxu0 0.0
    %588 = vmatpush1.msra.mxu0 0.0
    %589 = vmatprep.subr.mxu0 0.0
    %590 = vmatpush1.msra.mxu0 0.0
    %591 = vmatprep.subr.mxu0 0.0
    %592 = vmatpush1.msra.mxu0 0.0
    %593 = vmatprep.subr.mxu0 0.0
    %594 = vmatpush1.msra.mxu0 0.0
    %595 = vmatprep.subr.mxu0 0.0
    %596 = vmatpush1.msra.mxu0 0.0
    %597 = vmatprep.subr.mxu0 0.0
    %598 = vmatpush1.msra.mxu0 0.0
    %599 = vmatprep.subr.mxu0 0.0
    %600 = vmatpush1.msra.mxu0 0.0
    %601 = vmatprep.subr.mxu0 0.0
    %602 = vmatpush1.msra.mxu0 0.0
    %603 = vmatprep.subr.mxu0 0.0
    %604 = vmatpush1.msra.mxu0 0.0
    %605 = vmatprep.subr.mxu0 0.0
    %606 = vmatpush1.msra.mxu0 0.0
    %607 = vmatprep.mubr.f32.mxu0 0.0
    %608 = vmatmul.mubr.f32.gmra.mrb[0].mxu0 %v245
    %v609 = vpop.f32.mrb[0].mxu0
    %v610 = vadd.f32 0.0, %v609
    %v611 = vpop.f32.mrb[0].mxu0
    %612 = vdwg.mxu0
    %v613 = vld [vmem:[%s6 + $0x200] sm:$0xff]
    %v614 = vld [vmem:[%s6 + $0x208] sm:$0xff]
    %v615 = vld [vmem:[%s6 + $0x210] sm:$0xff]
    %v616 = vld [vmem:[%s6 + $0x218] sm:$0xff]
    %v617 = vld [vmem:[%s6 + $0x220] sm:$0xff]
    %v618 = vld [vmem:[%s6 + $0x228] sm:$0xff]
    %v619 = vld [vmem:[%s6 + $0x230] sm:$0xff]
    %v620 = vld [vmem:[%s6 + $0x238] sm:$0xff]
    %621 = vmatprep.subr.mxu0 0.0
    %622 = vmatpush1.msra.mxu0 %v613
    %623 = vmatprep.subr.mxu0 0.0
    %624 = vmatpush1.msra.mxu0 %v614
    %625 = vmatprep.subr.mxu0 0.0
    %626 = vmatpush1.msra.mxu0 %v615
    %627 = vmatprep.subr.mxu0 0.0
    %628 = vmatpush1.msra.mxu0 %v616
    %629 = vmatprep.subr.mxu0 0.0
    %630 = vmatpush1.msra.mxu0 0.0
    %631 = vmatprep.subr.mxu0 0.0
    %632 = vmatpush1.msra.mxu0 0.0
    %633 = vmatprep.subr.mxu0 0.0
    %634 = vmatpush1.msra.mxu0 0.0
    %635 = vmatprep.subr.mxu0 0.0
    %636 = vmatpush1.msra.mxu0 0.0
    %637 = vmatprep.subr.mxu0 0.0
    %638 = vmatpush1.msra.mxu0 0.0
    %639 = vmatprep.subr.mxu0 0.0
    %640 = vmatpush1.msra.mxu0 0.0
    %641 = vmatprep.subr.mxu0 0.0
    %642 = vmatpush1.msra.mxu0 0.0
    %643 = vmatprep.subr.mxu0 0.0
    %644 = vmatpush1.msra.mxu0 0.0
    %645 = vmatprep.subr.mxu0 0.0
    %646 = vmatpush1.msra.mxu0 0.0
    %647 = vmatprep.subr.mxu0 0.0
    %648 = vmatpush1.msra.mxu0 0.0
    %649 = vmatprep.subr.mxu0 0.0
    %650 = vmatpush1.msra.mxu0 0.0
    %651 = vmatprep.subr.mxu0 0.0
    %652 = vmatpush1.msra.mxu0 0.0
    %653 = vmatprep.subr.mxu0 0.0
    %654 = vmatpush1.msra.mxu0 0.0
    %655 = vmatprep.subr.mxu0 0.0
    %656 = vmatpush1.msra.mxu0 0.0
    %657 = vmatprep.subr.mxu0 0.0
    %658 = vmatpush1.msra.mxu0 0.0
    %659 = vmatprep.subr.mxu0 0.0
    %660 = vmatpush1.msra.mxu0 0.0
    %661 = vmatprep.subr.mxu0 0.0
    %662 = vmatpush1.msra.mxu0 0.0
    %663 = vmatprep.subr.mxu0 0.0
    %664 = vmatpush1.msra.mxu0 0.0
    %665 = vmatprep.subr.mxu0 0.0
    %666 = vmatpush1.msra.mxu0 0.0
    %667 = vmatprep.subr.mxu0 0.0
    %668 = vmatpush1.msra.mxu0 0.0
    %669 = vmatprep.subr.mxu0 0.0
    %670 = vmatpush1.msra.mxu0 0.0
    %671 = vmatprep.subr.mxu0 0.0
    %672 = vmatpush1.msra.mxu0 0.0
    %673 = vmatprep.subr.mxu0 0.0
    %674 = vmatpush1.msra.mxu0 0.0
    %675 = vmatprep.subr.mxu0 0.0
    %676 = vmatpush1.msra.mxu0 0.0
    %677 = vmatprep.subr.mxu0 0.0
    %678 = vmatpush1.msra.mxu0 0.0
    %679 = vmatprep.subr.mxu0 0.0
    %680 = vmatpush1.msra.mxu0 0.0
    %681 = vmatprep.subr.mxu0 0.0
    %682 = vmatpush1.msra.mxu0 0.0
    %683 = vmatprep.subr.mxu0 0.0
    %684 = vmatpush1.msra.mxu0 0.0
    %685 = vmatprep.mubr.f32.mxu0 0.0
    %686 = vmatmul.mubr.f32.gmra.mrb[0].mxu0 %v172
    %v687 = vpop.f32.mrb[0].mxu0
    %v688 = vadd.f32 0.0, %v687
    %v689 = vpop.f32.mrb[0].mxu0
    %690 = vdwg.mxu0
    %691 = vmatprep.subr.mxu0 0.0
    %692 = vmatpush1.msra.mxu0 %v617
    %693 = vmatprep.subr.mxu0 0.0
    %694 = vmatpush1.msra.mxu0 %v618
    %695 = vmatprep.subr.mxu0 0.0
    %696 = vmatpush1.msra.mxu0 %v619
    %697 = vmatprep.subr.mxu0 0.0
    %698 = vmatpush1.msra.mxu0 %v620
    %699 = vmatprep.subr.mxu0 0.0
    %700 = vmatpush1.msra.mxu0 0.0
    %701 = vmatprep.subr.mxu0 0.0
    %702 = vmatpush1.msra.mxu0 0.0
    %703 = vmatprep.subr.mxu0 0.0
    %704 = vmatpush1.msra.mxu0 0.0
    %705 = vmatprep.subr.mxu0 0.0
    %706 = vmatpush1.msra.mxu0 0.0
    %707 = vmatprep.subr.mxu0 0.0
    %708 = vmatpush1.msra.mxu0 0.0
    %709 = vmatprep.subr.mxu0 0.0
    %710 = vmatpush1.msra.mxu0 0.0
    %711 = vmatprep.subr.mxu0 0.0
    %712 = vmatpush1.msra.mxu0 0.0
    %713 = vmatprep.subr.mxu0 0.0
    %714 = vmatpush1.msra.mxu0 0.0
    %715 = vmatprep.subr.mxu0 0.0
    %716 = vmatpush1.msra.mxu0 0.0
    %717 = vmatprep.subr.mxu0 0.0
    %718 = vmatpush1.msra.mxu0 0.0
    %719 = vmatprep.subr.mxu0 0.0
    %720 = vmatpush1.msra.mxu0 0.0
    %721 = vmatprep.subr.mxu0 0.0
    %722 = vmatpush1.msra.mxu0 0.0
    %723 = vmatprep.subr.mxu0 0.0
    %724 = vmatpush1.msra.mxu0 0.0
    %725 = vmatprep.subr.mxu0 0.0
    %726 = vmatpush1.msra.mxu0 0.0
    %727 = vmatprep.subr.mxu0 0.0
    %728 = vmatpush1.msra.mxu0 0.0
    %729 = vmatprep.subr.mxu0 0.0
    %730 = vmatpush1.msra.mxu0 0.0
    %731 = vmatprep.subr.mxu0 0.0
    %732 = vmatpush1.msra.mxu0 0.0
    %733 = vmatprep.subr.mxu0 0.0
    %734 = vmatpush1.msra.mxu0 0.0
    %735 = vmatprep.subr.mxu0 0.0
    %736 = vmatpush1.msra.mxu0 0.0
    %737 = vmatprep.subr.mxu0 0.0
    %738 = vmatpush1.msra.mxu0 0.0
    %739 = vmatprep.subr.mxu0 0.0
    %740 = vmatpush1.msra.mxu0 0.0
    %741 = vmatprep.subr.mxu0 0.0
    %742 = vmatpush1.msra.mxu0 0.0
    %743 = vmatprep.subr.mxu0 0.0
    %744 = vmatpush1.msra.mxu0 0.0
    %745 = vmatprep.subr.mxu0 0.0
    %746 = vmatpush1.msra.mxu0 0.0
    %747 = vmatprep.subr.mxu0 0.0
    %748 = vmatpush1.msra.mxu0 0.0
    %749 = vmatprep.subr.mxu0 0.0
    %750 = vmatpush1.msra.mxu0 0.0
    %751 = vmatprep.subr.mxu0 0.0
    %752 = vmatpush1.msra.mxu0 0.0
    %753 = vmatprep.subr.mxu0 0.0
    %754 = vmatpush1.msra.mxu0 0.0
    %755 = vmatprep.mubr.f32.mxu0 0.0
    %756 = vmatmul.mubr.f32.gmra.mrb[0].mxu0 %v245
    %v757 = vpop.f32.mrb[0].mxu0
    %v758 = vadd.f32 0.0, %v757
    %v759 = vpop.f32.mrb[0].mxu0
    %760 = vdwg.mxu0
    %v761 = vld [vmem:[%s5] sm:$0xff]
    %v762 = vld [vmem:[%s5 + $0x8] sm:$0xff]
    %v763 = vld [vmem:[%s5 + $0x10] sm:$0xff]
    %v764 = vld [vmem:[%s5 + $0x18] sm:$0xff]
    %v765 = vld [vmem:[%s5 + $0x20] sm:$0xff]
    %v766 = vld [vmem:[%s5 + $0x28] sm:$0xff]
    %v767 = vld [vmem:[%s5 + $0x30] sm:$0xff]
    %v768 = vld [vmem:[%s5 + $0x38] sm:$0xff]
    %v769 = vld [vmem:[%s5 + $0x40] sm:$0x1]
    %v770 = vld [vmem:[%s5 + $0x48] sm:$0x1]
    %771 = vmatprep.subr.mxu0 0.0
    %772 = vmatpush1.msra.mxu0 %v761
    %773 = vmatprep.subr.mxu0 0.0
    %774 = vmatpush1.msra.mxu0 %v762
    %775 = vmatprep.subr.mxu0 0.0
    %776 = vmatpush1.msra.mxu0 %v763
    %777 = vmatprep.subr.mxu0 0.0
    %778 = vmatpush1.msra.mxu0 %v764
    %779 = vmatprep.subr.mxu0 0.0
    %780 = vmatpush1.msra.mxu0 0.0
    %781 = vmatprep.subr.mxu0 0.0
    %782 = vmatpush1.msra.mxu0 0.0
    %783 = vmatprep.subr.mxu0 0.0
    %784 = vmatpush1.msra.mxu0 0.0
    %785 = vmatprep.subr.mxu0 0.0
    %786 = vmatpush1.msra.mxu0 0.0
    %787 = vmatprep.subr.mxu0 0.0
    %788 = vmatpush1.msra.mxu0 0.0
    %789 = vmatprep.subr.mxu0 0.0
    %790 = vmatpush1.msra.mxu0 0.0
    %791 = vmatprep.subr.mxu0 0.0
    %792 = vmatpush1.msra.mxu0 0.0
    %793 = vmatprep.subr.mxu0 0.0
    %794 = vmatpush1.msra.mxu0 0.0
    %795 = vmatprep.subr.mxu0 0.0
    %796 = vmatpush1.msra.mxu0 0.0
    %797 = vmatprep.subr.mxu0 0.0
    %798 = vmatpush1.msra.mxu0 0.0
    %799 = vmatprep.subr.mxu0 0.0
    %800 = vmatpush1.msra.mxu0 0.0
    %801 = vmatprep.subr.mxu0 0.0
    %802 = vmatpush1.msra.mxu0 0.0
    %803 = vmatprep.subr.mxu0 0.0
    %804 = vmatpush1.msra.mxu0 0.0
    %805 = vmatprep.subr.mxu0 0.0
    %806 = vmatpush1.msra.mxu0 0.0
    %807 = vmatprep.subr.mxu0 0.0
    %808 = vmatpush1.msra.mxu0 0.0
    %809 = vmatprep.subr.mxu0 0.0
    %810 = vmatpush1.msra.mxu0 0.0
    %811 = vmatprep.subr.mxu0 0.0
    %812 = vmatpush1.msra.mxu0 0.0
    %813 = vmatprep.subr.mxu0 0.0
    %814 = vmatpush1.msra.mxu0 0.0
    %815 = vmatprep.subr.mxu0 0.0
    %816 = vmatpush1.msra.mxu0 0.0
    %817 = vmatprep.subr.mxu0 0.0
    %818 = vmatpush1.msra.mxu0 0.0
    %819 = vmatprep.subr.mxu0 0.0
    %820 = vmatpush1.msra.mxu0 0.0
    %821 = vmatprep.subr.mxu0 0.0
    %822 = vmatpush1.msra.mxu0 0.0
    %823 = vmatprep.subr.mxu0 0.0
    %824 = vmatpush1.msra.mxu0 0.0
    %825 = vmatprep.subr.mxu0 0.0
    %826 = vmatpush1.msra.mxu0 0.0
    %827 = vmatprep.subr.mxu0 0.0
    %828 = vmatpush1.msra.mxu0 0.0
    %829 = vmatprep.subr.mxu0 0.0
    %830 = vmatpush1.msra.mxu0 0.0
    %831 = vmatprep.subr.mxu0 0.0
    %832 = vmatpush1.msra.mxu0 0.0
    %833 = vmatprep.subr.mxu0 0.0
    %834 = vmatpush1.msra.mxu0 0.0
    %835 = vmatprep.mubr.f32.mxu0 0.0
    %836 = vmatmul.mubr.f32.gmra.mrb[0].mxu0 %v245
    %v837 = vpop.f32.mrb[0].mxu0
    %v838 = vadd.f32 0.0, %v837
    %v839 = vpop.f32.mrb[0].mxu0
    %840 = vdwg.mxu0
    %v842 = vsel %vm81, %v66, 0
    %v845 = vsel %vm81, %v67, 0
    %847 = vmatprep.subr.mxu0 0.0
    %848 = vmatpush1.msra.mxu0 %v765
    %849 = vmatprep.subr.mxu0 0.0
    %850 = vmatpush1.msra.mxu0 %v766
    %851 = vmatprep.subr.mxu0 0.0
    %852 = vmatpush1.msra.mxu0 %v767
    %853 = vmatprep.subr.mxu0 0.0
    %854 = vmatpush1.msra.mxu0 %v768
    %855 = vmatprep.subr.mxu0 0.0
    %856 = vmatpush1.msra.mxu0 0.0
    %857 = vmatprep.subr.mxu0 0.0
    %858 = vmatpush1.msra.mxu0 0.0
    %859 = vmatprep.subr.mxu0 0.0
    %860 = vmatpush1.msra.mxu0 0.0
    %861 = vmatprep.subr.mxu0 0.0
    %862 = vmatpush1.msra.mxu0 0.0
    %863 = vmatprep.subr.mxu0 0.0
    %864 = vmatpush1.msra.mxu0 0.0
    %865 = vmatprep.subr.mxu0 0.0
    %866 = vmatpush1.msra.mxu0 0.0
    %867 = vmatprep.subr.mxu0 0.0
    %868 = vmatpush1.msra.mxu0 0.0
    %869 = vmatprep.subr.mxu0 0.0
    %870 = vmatpush1.msra.mxu0 0.0
    %871 = vmatprep.subr.mxu0 0.0
    %872 = vmatpush1.msra.mxu0 0.0
    %873 = vmatprep.subr.mxu0 0.0
    %874 = vmatpush1.msra.mxu0 0.0
    %875 = vmatprep.subr.mxu0 0.0
    %876 = vmatpush1.msra.mxu0 0.0
    %877 = vmatprep.subr.mxu0 0.0
    %878 = vmatpush1.msra.mxu0 0.0
    %879 = vmatprep.subr.mxu0 0.0
    %880 = vmatpush1.msra.mxu0 0.0
    %881 = vmatprep.subr.mxu0 0.0
    %882 = vmatpush1.msra.mxu0 0.0
    %883 = vmatprep.subr.mxu0 0.0
    %884 = vmatpush1.msra.mxu0 0.0
    %885 = vmatprep.subr.mxu0 0.0
    %886 = vmatpush1.msra.mxu0 0.0
    %887 = vmatprep.subr.mxu0 0.0
    %888 = vmatpush1.msra.mxu0 0.0
    %889 = vmatprep.subr.mxu0 0.0
    %890 = vmatpush1.msra.mxu0 0.0
    %891 = vmatprep.subr.mxu0 0.0
    %892 = vmatpush1.msra.mxu0 0.0
    %893 = vmatprep.subr.mxu0 0.0
    %894 = vmatpush1.msra.mxu0 0.0
    %895 = vmatprep.subr.mxu0 0.0
    %896 = vmatpush1.msra.mxu0 0.0
    %897 = vmatprep.subr.mxu0 0.0
    %898 = vmatpush1.msra.mxu0 0.0
    %899 = vmatprep.subr.mxu0 0.0
    %900 = vmatpush1.msra.mxu0 0.0
    %901 = vmatprep.subr.mxu0 0.0
    %902 = vmatpush1.msra.mxu0 0.0
    %903 = vmatprep.subr.mxu0 0.0
    %904 = vmatpush1.msra.mxu0 0.0
    %905 = vmatprep.subr.mxu0 0.0
    %906 = vmatpush1.msra.mxu0 0.0
    %907 = vmatprep.subr.mxu0 0.0
    %908 = vmatpush1.msra.mxu0 0.0
    %909 = vmatprep.subr.mxu0 0.0
    %910 = vmatpush1.msra.mxu0 0.0
    %911 = vmatprep.mubr.f32.mxu0 0.0
    %912 = vmatmul.mubr.f32.gmra.mrb[0].mxu0 %v842
    %v913 = vpop.f32.mrb[0].mxu0
    %v914 = vadd.f32 0.0, %v913
    %v915 = vpop.f32.mrb[0].mxu0
    %916 = vmatprep.mubr.f32.mxu0 0.0
    %917 = vmatmul.mubr.f32.gmra.mrb[0].mxu0 %v845
    %v918 = vpop.f32.mrb[0].mxu0
    %v919 = vadd.f32 0.0, %v918
    %v920 = vpop.f32.mrb[0].mxu0
    %921 = vdwg.mxu0
    %v924 = vunpack.c.l.s4 1966171168
    %v925 = vunpack.c.0.s8 %v924
    %v926 = vlaneseq
    %v927 = vshrl.u32 %v926, 7
    %v928 = vsub.s32 %v925, %v927
    %v929 = vrot.slane %v838, %v928
    %v930 = vcombine.high %v929, %v929
    %v932 = vunpack.c.l.s4 1966171168
    %v933 = vunpack.c.0.s8 %v932
    %v934 = vlaneseq
    %v935 = vshrl.u32 %v934, 7
    %v936 = vsub.s32 %v933, %v935
    %v937 = vrot.slane %v929, %v936
    %v939 = vunpack.c.l.s4 1966171168
    %v940 = vunpack.c.0.s8 %v939
    %v941 = vlaneseq
    %v942 = vshrl.u32 %v941, 7
    %v943 = vsub.s32 %v940, %v942
    %v944 = vrot.slane %v930, %v943
    %v945 = vlaneseq
    %v946 = vshrl.u32 %v945, 7
    %v947 = vsub.s32 0, %v946
    %v948 = vrot.slane %v937, %v947
    %v949 = vlaneseq
    %v950 = vshrl.u32 %v949, 7
    %v951 = vsub.s32 0, %v950
    %v952 = vrot.slane %v944, %v951
    %v955 = vadd.f32 %v914, %v948
    %v956 = vadd.f32 %v919, %v952
    %v957 = vlaneseq
    %v958 = vshrl.u32 %v957, 7
    %v959 = vsub.s32 0, %v958
    %v960 = vrot.slane %v769, %v959
    %v961 = vadd.f32 %v955, %v960
    %v962 = vadd.f32 %v956, %v960
    %v963 = vtanh.pop %v961
    %v964 = vtanh.pop %v962
    %v965 = vlaneseq
    %v966 = vshrl.u32 %v965, 7
    %v967 = vsub.s32 0, %v966
    %v968 = vrot.slane %v770, %v967
    %v969 = vmul.f32 %v963, %v968
    %v970 = vmul.f32 %v964, %v968
    %v971 = vsel %vm81, %v969, 0.0
    %972 = vadd.xlane.f32.xlu0 %v971
    %v973 = vpop.xlane.xlu0 %972
    %v974 = vsel %vm81, %v970, 0.0
    %975 = vadd.xlane.f32.xlu0 %v974
    %v976 = vpop.xlane.xlu0 %975
    %v979 = vlaneseq
    %v980 = vshrl.u32 %v979, 7
    %v981 = vsub.s32 %v70, %v980
    %v982 = vrot.slane %v973, %v981
    %v983 = vlaneseq
    %v984 = vshrl.u32 %v983, 7
    %v985 = vsub.s32 %v70, %v984
    %v986 = vrot.slane %v976, %v985
    %vm987 = vcmask 1041409
    %v988 = vsel %vm987, %v986, %v982
    %vm990 = vcmask 58368
    %v991 = vsel %vm990, %v988, -inf
    %992 = vmax.xlane.f32.xlu0 %v991
    %v993 = vpop.xlane.xlu0 %992
    %v995 = vlaneseq
    %v996 = vshrl.u32 %v995, 7
    %v997 = vsub.s32 0, %v996
    %v998 = vrot.slane %v993, %v997
    %v999 = vlaneseq
    %v1000 = vshrl.u32 %v999, 7
    %v1001 = vsub.s32 1, %v1000
    %v1002 = vrot.slane %v993, %v1001
    %v1005 = vsub.f32 %v973, %v998
    %v1006 = vsub.f32 %v976, %v1002
    %v1007 = vmul.f32 %v1005, 1.442695
    %v1008 = vpow.pop %v1007
    %v1009 = vmul.f32 %v1006, 1.442695
    %v1010 = vpow.pop %v1009
    %1013 = vset.pattern.permute.xlu0 0
    %1014 = vperm.xlu0 %1013, %v1008
    %v1015 = vpop.permute.xlu0 %1014
    %1016 = vset.pattern.permute.xlu0 0
    %1017 = vperm.xlu0 %1016, %v1010
    %v1018 = vpop.permute.xlu0 %1017
    %v1019 = vlaneseq
    %v1020 = vshrl.u32 %v1019, 7
    %v1021 = vsub.s32 %v70, %v1020
    %v1022 = vrot.slane %v1015, %v1021
    %v1023 = vlaneseq
    %v1024 = vshrl.u32 %v1023, 7
    %v1025 = vsub.s32 %v70, %v1024
    %v1026 = vrot.slane %v1018, %v1025
    %v1027 = vsel %vm987, %v1026, %v1022
    %v1029 = vsel %vm990, %v1027, 0.0
    %1030 = vadd.xlane.f32.xlu0 %v1029
    %v1031 = vpop.xlane.xlu0 %1030
    %v1033 = vlaneseq
    %v1034 = vshrl.u32 %v1033, 7
    %v1035 = vsub.s32 0, %v1034
    %v1036 = vrot.slane %v1031, %v1035
    %v1037 = vlaneseq
    %v1038 = vshrl.u32 %v1037, 7
    %v1039 = vsub.s32 1, %v1038
    %v1040 = vrot.slane %v1031, %v1039
    %v1043 = vrcp.pop %v1036
    %v1044 = vmul.f32 %v1008, %v1043
    %v1045 = vrcp.pop %v1040
    %v1046 = vmul.f32 %v1010, %v1045
    %1048 = vset.pattern.permute.xlu0 0
    %1049 = vperm.xlu0 %1048, %v1044
    %v1050 = vpop.permute.xlu0 %1049
    %1053 = vset.pattern.permute.xlu0 0
    %1054 = vperm.xlu0 %1053, %v1046
    %v1055 = vpop.permute.xlu0 %1054
    %v1057 = vmul.f32 %v1050, %v66
    %v1058 = vmul.f32 %v1055, %v67
    %v1059 = vsel %vm81, %v1057, 0.0
    %v1060 = vrot.slane %v1059, 4
    %v1061 = vadd.f32 %v1059, %v1060
    %v1062 = vrot.slane %v1061, 2
    %v1063 = vadd.f32 %v1061, %v1062
    %v1064 = vrot.slane %v1063, 1
    %v1065 = vadd.f32 %v1063, %v1064
    %v1066 = vsel %vm81, %v1058, 0.0
    %v1067 = vrot.slane %v1066, 4
    %v1068 = vadd.f32 %v1066, %v1067
    %v1069 = vrot.slane %v1068, 2
    %v1070 = vadd.f32 %v1068, %v1069
    %v1071 = vrot.slane %v1070, 1
    %v1072 = vadd.f32 %v1070, %v1071
    %v1073 = vld [vmem:[%s7 + $0x20] sm:$0xff]
    %v1074 = vld [vmem:[%s7 + $0x28] sm:$0xff]
    %v1075 = vld [vmem:[%s7 + $0x30] sm:$0xff]
    %v1076 = vld [vmem:[%s7 + $0x38] sm:$0xff]
    %v1079 = vsel %vm987, %v1072, %v1065
    %v1080 = vsel %vm81, %v1079, 0
    %1082 = vmatprep.subr.mxu0 0.0
    %1083 = vmatpush1.msra.mxu0 %v1073
    %1084 = vmatprep.subr.mxu0 0.0
    %1085 = vmatpush1.msra.mxu0 %v1074
    %1086 = vmatprep.subr.mxu0 0.0
    %1087 = vmatpush1.msra.mxu0 %v1075
    %1088 = vmatprep.subr.mxu0 0.0
    %1089 = vmatpush1.msra.mxu0 %v1076
    %1090 = vmatprep.subr.mxu0 0.0
    %1091 = vmatpush1.msra.mxu0 0.0
    %1092 = vmatprep.subr.mxu0 0.0
    %1093 = vmatpush1.msra.mxu0 0.0
    %1094 = vmatprep.subr.mxu0 0.0
    %1095 = vmatpush1.msra.mxu0 0.0
    %1096 = vmatprep.subr.mxu0 0.0
    %1097 = vmatpush1.msra.mxu0 0.0
    %1098 = vmatprep.subr.mxu0 0.0
    %1099 = vmatpush1.msra.mxu0 0.0
    %1100 = vmatprep.subr.mxu0 0.0
    %1101 = vmatpush1.msra.mxu0 0.0
    %1102 = vmatprep.subr.mxu0 0.0
    %1103 = vmatpush1.msra.mxu0 0.0
    %1104 = vmatprep.subr.mxu0 0.0
    %1105 = vmatpush1.msra.mxu0 0.0
    %1106 = vmatprep.subr.mxu0 0.0
    %1107 = vmatpush1.msra.mxu0 0.0
    %1108 = vmatprep.subr.mxu0 0.0
    %1109 = vmatpush1.msra.mxu0 0.0
    %1110 = vmatprep.subr.mxu0 0.0
    %1111 = vmatpush1.msra.mxu0 0.0
    %1112 = vmatprep.subr.mxu0 0.0
    %1113 = vmatpush1.msra.mxu0 0.0
    %1114 = vmatprep.subr.mxu0 0.0
    %1115 = vmatpush1.msra.mxu0 0.0
    %1116 = vmatprep.subr.mxu0 0.0
    %1117 = vmatpush1.msra.mxu0 0.0
    %1118 = vmatprep.subr.mxu0 0.0
    %1119 = vmatpush1.msra.mxu0 0.0
    %1120 = vmatprep.subr.mxu0 0.0
    %1121 = vmatpush1.msra.mxu0 0.0
    %1122 = vmatprep.subr.mxu0 0.0
    %1123 = vmatpush1.msra.mxu0 0.0
    %1124 = vmatprep.subr.mxu0 0.0
    %1125 = vmatpush1.msra.mxu0 0.0
    %1126 = vmatprep.subr.mxu0 0.0
    %1127 = vmatpush1.msra.mxu0 0.0
    %1128 = vmatprep.subr.mxu0 0.0
    %1129 = vmatpush1.msra.mxu0 0.0
    %1130 = vmatprep.subr.mxu0 0.0
    %1131 = vmatpush1.msra.mxu0 0.0
    %1132 = vmatprep.subr.mxu0 0.0
    %1133 = vmatpush1.msra.mxu0 0.0
    %1134 = vmatprep.subr.mxu0 0.0
    %1135 = vmatpush1.msra.mxu0 0.0
    %1136 = vmatprep.subr.mxu0 0.0
    %1137 = vmatpush1.msra.mxu0 0.0
    %1138 = vmatprep.subr.mxu0 0.0
    %1139 = vmatpush1.msra.mxu0 0.0
    %1140 = vmatprep.subr.mxu0 0.0
    %1141 = vmatpush1.msra.mxu0 0.0
    %1142 = vmatprep.subr.mxu0 0.0
    %1143 = vmatpush1.msra.mxu0 0.0
    %1144 = vmatprep.subr.mxu0 0.0
    %1145 = vmatpush1.msra.mxu0 0.0
    %1146 = vmatprep.mubr.f32.mxu0 0.0
    %1147 = vmatmul.mubr.f32.gmra.mrb[0].mxu0 %v1080
    %v1148 = vpop.f32.mrb[0].mxu0
    %v1149 = vadd.f32 0.0, %v1148
    %v1150 = vpop.f32.mrb[0].mxu0
    %1151 = vdwg.mxu0
    %v1152 = vld [vmem:[%s6 + $0x40] sm:$0xff]
    %v1153 = vld [vmem:[%s6 + $0x48] sm:$0xff]
    %v1154 = vld [vmem:[%s6 + $0x50] sm:$0xff]
    %v1155 = vld [vmem:[%s6 + $0x58] sm:$0xff]
    %1156 = vmatprep.subr.mxu0 0.0
    %1157 = vmatpush1.msra.mxu0 %v1152
    %1158 = vmatprep.subr.mxu0 0.0
    %1159 = vmatpush1.msra.mxu0 %v1153
    %1160 = vmatprep.subr.mxu0 0.0
    %1161 = vmatpush1.msra.mxu0 %v1154
    %1162 = vmatprep.subr.mxu0 0.0
    %1163 = vmatpush1.msra.mxu0 %v1155
    %1164 = vmatprep.subr.mxu0 0.0
    %1165 = vmatpush1.msra.mxu0 0.0
    %1166 = vmatprep.subr.mxu0 0.0
    %1167 = vmatpush1.msra.mxu0 0.0
    %1168 = vmatprep.subr.mxu0 0.0
    %1169 = vmatpush1.msra.mxu0 0.0
    %1170 = vmatprep.subr.mxu0 0.0
    %1171 = vmatpush1.msra.mxu0 0.0
    %1172 = vmatprep.subr.mxu0 0.0
    %1173 = vmatpush1.msra.mxu0 0.0
    %1174 = vmatprep.subr.mxu0 0.0
    %1175 = vmatpush1.msra.mxu0 0.0
    %1176 = vmatprep.subr.mxu0 0.0
    %1177 = vmatpush1.msra.mxu0 0.0
    %1178 = vmatprep.subr.mxu0 0.0
    %1179 = vmatpush1.msra.mxu0 0.0
    %1180 = vmatprep.subr.mxu0 0.0
    %1181 = vmatpush1.msra.mxu0 0.0
    %1182 = vmatprep.subr.mxu0 0.0
    %1183 = vmatpush1.msra.mxu0 0.0
    %1184 = vmatprep.subr.mxu0 0.0
    %1185 = vmatpush1.msra.mxu0 0.0
    %1186 = vmatprep.subr.mxu0 0.0
    %1187 = vmatpush1.msra.mxu0 0.0
    %1188 = vmatprep.subr.mxu0 0.0
    %1189 = vmatpush1.msra.mxu0 0.0
    %1190 = vmatprep.subr.mxu0 0.0
    %1191 = vmatpush1.msra.mxu0 0.0
    %1192 = vmatprep.subr.mxu0 0.0
    %1193 = vmatpush1.msra.mxu0 0.0
    %1194 = vmatprep.subr.mxu0 0.0
    %1195 = vmatpush1.msra.mxu0 0.0
    %1196 = vmatprep.subr.mxu0 0.0
    %1197 = vmatpush1.msra.mxu0 0.0
    %1198 = vmatprep.subr.mxu0 0.0
    %1199 = vmatpush1.msra.mxu0 0.0
    %1200 = vmatprep.subr.mxu0 0.0
    %1201 = vmatpush1.msra.mxu0 0.0
    %1202 = vmatprep.subr.mxu0 0.0
    %1203 = vmatpush1.msra.mxu0 0.0
    %1204 = vmatprep.subr.mxu0 0.0
    %1205 = vmatpush1.msra.mxu0 0.0
    %1206 = vmatprep.subr.mxu0 0.0
    %1207 = vmatpush1.msra.mxu0 0.0
    %1208 = vmatprep.subr.mxu0 0.0
    %1209 = vmatpush1.msra.mxu0 0.0
    %1210 = vmatprep.subr.mxu0 0.0
    %1211 = vmatpush1.msra.mxu0 0.0
    %1212 = vmatprep.subr.mxu0 0.0
    %1213 = vmatpush1.msra.mxu0 0.0
    %1214 = vmatprep.subr.mxu0 0.0
    %1215 = vmatpush1.msra.mxu0 0.0
    %1216 = vmatprep.subr.mxu0 0.0
    %1217 = vmatpush1.msra.mxu0 0.0
    %1218 = vmatprep.subr.mxu0 0.0
    %1219 = vmatpush1.msra.mxu0 0.0
    %1220 = vmatprep.mubr.f32.mxu0 0.0
    %1221 = vmatmul.mubr.f32.gmra.mrb[0].mxu0 %v1080
    %v1222 = vpop.f32.mrb[0].mxu0
    %v1223 = vadd.f32 0.0, %v1222
    %v1224 = vpop.f32.mrb[0].mxu0
    %1225 = vdwg.mxu0
    %v1226 = vld [vmem:[%s6 + $0x60] sm:$0xff]
    %v1227 = vld [vmem:[%s6 + $0x68] sm:$0xff]
    %v1228 = vld [vmem:[%s6 + $0x70] sm:$0xff]
    %v1229 = vld [vmem:[%s6 + $0x78] sm:$0xff]
    %1230 = vmatprep.subr.mxu0 0.0
    %1231 = vmatpush1.msra.mxu0 %v1226
    %1232 = vmatprep.subr.mxu0 0.0
    %1233 = vmatpush1.msra.mxu0 %v1227
    %1234 = vmatprep.subr.mxu0 0.0
    %1235 = vmatpush1.msra.mxu0 %v1228
    %1236 = vmatprep.subr.mxu0 0.0
    %1237 = vmatpush1.msra.mxu0 %v1229
    %1238 = vmatprep.subr.mxu0 0.0
    %1239 = vmatpush1.msra.mxu0 0.0
    %1240 = vmatprep.subr.mxu0 0.0
    %1241 = vmatpush1.msra.mxu0 0.0
    %1242 = vmatprep.subr.mxu0 0.0
    %1243 = vmatpush1.msra.mxu0 0.0
    %1244 = vmatprep.subr.mxu0 0.0
    %1245 = vmatpush1.msra.mxu0 0.0
    %1246 = vmatprep.subr.mxu0 0.0
    %1247 = vmatpush1.msra.mxu0 0.0
    %1248 = vmatprep.subr.mxu0 0.0
    %1249 = vmatpush1.msra.mxu0 0.0
    %1250 = vmatprep.subr.mxu0 0.0
    %1251 = vmatpush1.msra.mxu0 0.0
    %1252 = vmatprep.subr.mxu0 0.0
    %1253 = vmatpush1.msra.mxu0 0.0
    %1254 = vmatprep.subr.mxu0 0.0
    %1255 = vmatpush1.msra.mxu0 0.0
    %1256 = vmatprep.subr.mxu0 0.0
    %1257 = vmatpush1.msra.mxu0 0.0
    %1258 = vmatprep.subr.mxu0 0.0
    %1259 = vmatpush1.msra.mxu0 0.0
    %1260 = vmatprep.subr.mxu0 0.0
    %1261 = vmatpush1.msra.mxu0 0.0
    %1262 = vmatprep.subr.mxu0 0.0
    %1263 = vmatpush1.msra.mxu0 0.0
    %1264 = vmatprep.subr.mxu0 0.0
    %1265 = vmatpush1.msra.mxu0 0.0
    %1266 = vmatprep.subr.mxu0 0.0
    %1267 = vmatpush1.msra.mxu0 0.0
    %1268 = vmatprep.subr.mxu0 0.0
    %1269 = vmatpush1.msra.mxu0 0.0
    %1270 = vmatprep.subr.mxu0 0.0
    %1271 = vmatpush1.msra.mxu0 0.0
    %1272 = vmatprep.subr.mxu0 0.0
    %1273 = vmatpush1.msra.mxu0 0.0
    %1274 = vmatprep.subr.mxu0 0.0
    %1275 = vmatpush1.msra.mxu0 0.0
    %1276 = vmatprep.subr.mxu0 0.0
    %1277 = vmatpush1.msra.mxu0 0.0
    %1278 = vmatprep.subr.mxu0 0.0
    %1279 = vmatpush1.msra.mxu0 0.0
    %1280 = vmatprep.subr.mxu0 0.0
    %1281 = vmatpush1.msra.mxu0 0.0
    %1282 = vmatprep.subr.mxu0 0.0
    %1283 = vmatpush1.msra.mxu0 0.0
    %1284 = vmatprep.subr.mxu0 0.0
    %1285 = vmatpush1.msra.mxu0 0.0
    %1286 = vmatprep.subr.mxu0 0.0
    %1287 = vmatpush1.msra.mxu0 0.0
    %1288 = vmatprep.subr.mxu0 0.0
    %1289 = vmatpush1.msra.mxu0 0.0
    %1290 = vmatprep.subr.mxu0 0.0
    %1291 = vmatpush1.msra.mxu0 0.0
    %1292 = vmatprep.subr.mxu0 0.0
    %1293 = vmatpush1.msra.mxu0 0.0
    %1294 = vmatprep.mubr.f32.mxu0 0.0
    %1295 = vmatmul.mubr.f32.gmra.mrb[0].mxu0 %v1080
    %v1296 = vpop.f32.mrb[0].mxu0
    %v1297 = vadd.f32 0.0, %v1296
    %v1298 = vpop.f32.mrb[0].mxu0
    %1299 = vdwg.mxu0
    %v1300 = vld [vmem:[%s6 + $0x80] sm:$0xff]
    %v1301 = vld [vmem:[%s6 + $0x88] sm:$0xff]
    %v1302 = vld [vmem:[%s6 + $0x90] sm:$0xff]
    %v1303 = vld [vmem:[%s6 + $0x98] sm:$0xff]
    %1304 = vmatprep.subr.mxu0 0.0
    %1305 = vmatpush1.msra.mxu0 %v1300
    %1306 = vmatprep.subr.mxu0 0.0
    %1307 = vmatpush1.msra.mxu0 %v1301
    %1308 = vmatprep.subr.mxu0 0.0
    %1309 = vmatpush1.msra.mxu0 %v1302
    %1310 = vmatprep.subr.mxu0 0.0
    %1311 = vmatpush1.msra.mxu0 %v1303
    %1312 = vmatprep.subr.mxu0 0.0
    %1313 = vmatpush1.msra.mxu0 0.0
    %1314 = vmatprep.subr.mxu0 0.0
    %1315 = vmatpush1.msra.mxu0 0.0
    %1316 = vmatprep.subr.mxu0 0.0
    %1317 = vmatpush1.msra.mxu0 0.0
    %1318 = vmatprep.subr.mxu0 0.0
    %1319 = vmatpush1.msra.mxu0 0.0
    %1320 = vmatprep.subr.mxu0 0.0
    %1321 = vmatpush1.msra.mxu0 0.0
    %1322 = vmatprep.subr.mxu0 0.0
    %1323 = vmatpush1.msra.mxu0 0.0
    %1324 = vmatprep.subr.mxu0 0.0
    %1325 = vmatpush1.msra.mxu0 0.0
    %1326 = vmatprep.subr.mxu0 0.0
    %1327 = vmatpush1.msra.mxu0 0.0
    %1328 = vmatprep.subr.mxu0 0.0
    %1329 = vmatpush1.msra.mxu0 0.0
    %1330 = vmatprep.subr.mxu0 0.0
    %1331 = vmatpush1.msra.mxu0 0.0
    %1332 = vmatprep.subr.mxu0 0.0
    %1333 = vmatpush1.msra.mxu0 0.0
    %1334 = vmatprep.subr.mxu0 0.0
    %1335 = vmatpush1.msra.mxu0 0.0
    %1336 = vmatprep.subr.mxu0 0.0
    %1337 = vmatpush1.msra.mxu0 0.0
    %1338 = vmatprep.subr.mxu0 0.0
    %1339 = vmatpush1.msra.mxu0 0.0
    %1340 = vmatprep.subr.mxu0 0.0
    %1341 = vmatpush1.msra.mxu0 0.0
    %1342 = vmatprep.subr.mxu0 0.0
    %1343 = vmatpush1.msra.mxu0 0.0
    %1344 = vmatprep.subr.mxu0 0.0
    %1345 = vmatpush1.msra.mxu0 0.0
    %1346 = vmatprep.subr.mxu0 0.0
    %1347 = vmatpush1.msra.mxu0 0.0
    %1348 = vmatprep.subr.mxu0 0.0
    %1349 = vmatpush1.msra.mxu0 0.0
    %1350 = vmatprep.subr.mxu0 0.0
    %1351 = vmatpush1.msra.mxu0 0.0
    %1352 = vmatprep.subr.mxu0 0.0
    %1353 = vmatpush1.msra.mxu0 0.0
    %1354 = vmatprep.subr.mxu0 0.0
    %1355 = vmatpush1.msra.mxu0 0.0
    %1356 = vmatprep.subr.mxu0 0.0
    %1357 = vmatpush1.msra.mxu0 0.0
    %1358 = vmatprep.subr.mxu0 0.0
    %1359 = vmatpush1.msra.mxu0 0.0
    %1360 = vmatprep.subr.mxu0 0.0
    %1361 = vmatpush1.msra.mxu0 0.0
    %1362 = vmatprep.subr.mxu0 0.0
    %1363 = vmatpush1.msra.mxu0 0.0
    %1364 = vmatprep.subr.mxu0 0.0
    %1365 = vmatpush1.msra.mxu0 0.0
    %1366 = vmatprep.subr.mxu0 0.0
    %1367 = vmatpush1.msra.mxu0 0.0
    %1368 = vmatprep.mubr.f32.mxu0 0.0
    %1369 = vmatmul.mubr.f32.gmra.mrb[0].mxu0 %v1080
    %v1370 = vpop.f32.mrb[0].mxu0
    %v1371 = vadd.f32 0.0, %v1370
    %v1372 = vpop.f32.mrb[0].mxu0
    %1373 = vdwg.mxu0
    %v1374 = vld [vmem:[%s6 + $0xa0] sm:$0xff]
    %v1375 = vld [vmem:[%s6 + $0xa8] sm:$0xff]
    %v1376 = vld [vmem:[%s6 + $0xb0] sm:$0xff]
    %v1377 = vld [vmem:[%s6 + $0xb8] sm:$0xff]
    %1378 = vmatprep.subr.mxu0 0.0
    %1379 = vmatpush1.msra.mxu0 %v1374
    %1380 = vmatprep.subr.mxu0 0.0
    %1381 = vmatpush1.msra.mxu0 %v1375
    %1382 = vmatprep.subr.mxu0 0.0
    %1383 = vmatpush1.msra.mxu0 %v1376
    %1384 = vmatprep.subr.mxu0 0.0
    %1385 = vmatpush1.msra.mxu0 %v1377
    %1386 = vmatprep.subr.mxu0 0.0
    %1387 = vmatpush1.msra.mxu0 0.0
    %1388 = vmatprep.subr.mxu0 0.0
    %1389 = vmatpush1.msra.mxu0 0.0
    %1390 = vmatprep.subr.mxu0 0.0
    %1391 = vmatpush1.msra.mxu0 0.0
    %1392 = vmatprep.subr.mxu0 0.0
    %1393 = vmatpush1.msra.mxu0 0.0
    %1394 = vmatprep.subr.mxu0 0.0
    %1395 = vmatpush1.msra.mxu0 0.0
    %1396 = vmatprep.subr.mxu0 0.0
    %1397 = vmatpush1.msra.mxu0 0.0
    %1398 = vmatprep.subr.mxu0 0.0
    %1399 = vmatpush1.msra.mxu0 0.0
    %1400 = vmatprep.subr.mxu0 0.0
    %1401 = vmatpush1.msra.mxu0 0.0
    %1402 = vmatprep.subr.mxu0 0.0
    %1403 = vmatpush1.msra.mxu0 0.0
    %1404 = vmatprep.subr.mxu0 0.0
    %1405 = vmatpush1.msra.mxu0 0.0
    %1406 = vmatprep.subr.mxu0 0.0
    %1407 = vmatpush1.msra.mxu0 0.0
    %1408 = vmatprep.subr.mxu0 0.0
    %1409 = vmatpush1.msra.mxu0 0.0
    %1410 = vmatprep.subr.mxu0 0.0
    %1411 = vmatpush1.msra.mxu0 0.0
    %1412 = vmatprep.subr.mxu0 0.0
    %1413 = vmatpush1.msra.mxu0 0.0
    %1414 = vmatprep.subr.mxu0 0.0
    %1415 = vmatpush1.msra.mxu0 0.0
    %1416 = vmatprep.subr.mxu0 0.0
    %1417 = vmatpush1.msra.mxu0 0.0
    %1418 = vmatprep.subr.mxu0 0.0
    %1419 = vmatpush1.msra.mxu0 0.0
    %1420 = vmatprep.subr.mxu0 0.0
    %1421 = vmatpush1.msra.mxu0 0.0
    %1422 = vmatprep.subr.mxu0 0.0
    %1423 = vmatpush1.msra.mxu0 0.0
    %1424 = vmatprep.subr.mxu0 0.0
    %1425 = vmatpush1.msra.mxu0 0.0
    %1426 = vmatprep.subr.mxu0 0.0
    %1427 = vmatpush1.msra.mxu0 0.0
    %1428 = vmatprep.subr.mxu0 0.0
    %1429 = vmatpush1.msra.mxu0 0.0
    %1430 = vmatprep.subr.mxu0 0.0
    %1431 = vmatpush1.msra.mxu0 0.0
    %1432 = vmatprep.subr.mxu0 0.0
    %1433 = vmatpush1.msra.mxu0 0.0
    %1434 = vmatprep.subr.mxu0 0.0
    %1435 = vmatpush1.msra.mxu0 0.0
    %1436 = vmatprep.subr.mxu0 0.0
    %1437 = vmatpush1.msra.mxu0 0.0
    %1438 = vmatprep.subr.mxu0 0.0
    %1439 = vmatpush1.msra.mxu0 0.0
    %1440 = vmatprep.subr.mxu0 0.0
    %1441 = vmatpush1.msra.mxu0 0.0
    %1442 = vmatprep.mubr.f32.mxu0 0.0
    %1443 = vmatmul.mubr.f32.gmra.mrb[0].mxu0 %v1080
    %v1444 = vpop.f32.mrb[0].mxu0
    %v1445 = vadd.f32 0.0, %v1444
    %v1446 = vpop.f32.mrb[0].mxu0
    %1447 = vdwg.mxu0
    %v1448 = vld [vmem:[%s6 + $0x240] sm:$0x1]
    %vm1449 = vcmask 130048
    %v1451 = vsel %vm1449, %v152, 0
    %1453 = vmatprep.subr.mxu0 0.0
    %1454 = vmatpush1.msra.mxu0 %v155
    %1455 = vmatprep.subr.mxu0 0.0
    %1456 = vmatpush1.msra.mxu0 %v156
    %1457 = vmatprep.subr.mxu0 0.0
    %1458 = vmatpush1.msra.mxu0 0.0
    %1459 = vmatprep.subr.mxu0 0.0
    %1460 = vmatpush1.msra.mxu0 0.0
    %1461 = vmatprep.subr.mxu0 0.0
    %1462 = vmatpush1.msra.mxu0 0.0
    %1463 = vmatprep.subr.mxu0 0.0
    %1464 = vmatpush1.msra.mxu0 0.0
    %1465 = vmatprep.subr.mxu0 0.0
    %1466 = vmatpush1.msra.mxu0 0.0
    %1467 = vmatprep.subr.mxu0 0.0
    %1468 = vmatpush1.msra.mxu0 0.0
    %1469 = vmatprep.subr.mxu0 0.0
    %1470 = vmatpush1.msra.mxu0 0.0
    %1471 = vmatprep.subr.mxu0 0.0
    %1472 = vmatpush1.msra.mxu0 0.0
    %1473 = vmatprep.subr.mxu0 0.0
    %1474 = vmatpush1.msra.mxu0 0.0
    %1475 = vmatprep.subr.mxu0 0.0
    %1476 = vmatpush1.msra.mxu0 0.0
    %1477 = vmatprep.subr.mxu0 0.0
    %1478 = vmatpush1.msra.mxu0 0.0
    %1479 = vmatprep.subr.mxu0 0.0
    %1480 = vmatpush1.msra.mxu0 0.0
    %1481 = vmatprep.subr.mxu0 0.0
    %1482 = vmatpush1.msra.mxu0 0.0
    %1483 = vmatprep.subr.mxu0 0.0
    %1484 = vmatpush1.msra.mxu0 0.0
    %1485 = vmatprep.subr.mxu0 0.0
    %1486 = vmatpush1.msra.mxu0 0.0
    %1487 = vmatprep.subr.mxu0 0.0
    %1488 = vmatpush1.msra.mxu0 0.0
    %1489 = vmatprep.subr.mxu0 0.0
    %1490 = vmatpush1.msra.mxu0 0.0
    %1491 = vmatprep.subr.mxu0 0.0
    %1492 = vmatpush1.msra.mxu0 0.0
    %1493 = vmatprep.subr.mxu0 0.0
    %1494 = vmatpush1.msra.mxu0 0.0
    %1495 = vmatprep.subr.mxu0 0.0
    %1496 = vmatpush1.msra.mxu0 0.0
    %1497 = vmatprep.subr.mxu0 0.0
    %1498 = vmatpush1.msra.mxu0 0.0
    %1499 = vmatprep.subr.mxu0 0.0
    %1500 = vmatpush1.msra.mxu0 0.0
    %1501 = vmatprep.subr.mxu0 0.0
    %1502 = vmatpush1.msra.mxu0 0.0
    %1503 = vmatprep.subr.mxu0 0.0
    %1504 = vmatpush1.msra.mxu0 0.0
    %1505 = vmatprep.subr.mxu0 0.0
    %1506 = vmatpush1.msra.mxu0 0.0
    %1507 = vmatprep.subr.mxu0 0.0
    %1508 = vmatpush1.msra.mxu0 0.0
    %1509 = vmatprep.subr.mxu0 0.0
    %1510 = vmatpush1.msra.mxu0 0.0
    %1511 = vmatprep.subr.mxu0 0.0
    %1512 = vmatpush1.msra.mxu0 0.0
    %1513 = vmatprep.subr.mxu0 0.0
    %1514 = vmatpush1.msra.mxu0 0.0
    %1515 = vmatprep.subr.mxu0 0.0
    %1516 = vmatpush1.msra.mxu0 0.0
    %1517 = vmatprep.mubr.f32.mxu0 0.0
    %1518 = vmatmul.mubr.f32.gmra.mrb[0].mxu0 %v1451
    %v1519 = vpop.f32.mrb[0].mxu0
    %v1520 = vadd.f32 %v1223, %v1519
    %v1521 = vpop.f32.mrb[0].mxu0
    %1522 = vdwg.mxu0
    %v1523 = vadd.f32 %v1520, %v241
    %v1524 = vlaneseq
    %v1525 = vshrl.u32 %v1524, 7
    %v1526 = vsub.s32 0, %v1525
    %v1527 = vrot.slane %v1448, %v1526
    %v1528 = vadd.f32 %v1523, %v1527
    %v1529 = vld [vmem:[%s6 + $0x241] sm:$0x1]
    %1530 = vmatprep.subr.mxu0 0.0
    %1531 = vmatpush1.msra.mxu0 %v157
    %1532 = vmatprep.subr.mxu0 0.0
    %1533 = vmatpush1.msra.mxu0 %v158
    %1534 = vmatprep.subr.mxu0 0.0
    %1535 = vmatpush1.msra.mxu0 0.0
    %1536 = vmatprep.subr.mxu0 0.0
    %1537 = vmatpush1.msra.mxu0 0.0
    %1538 = vmatprep.subr.mxu0 0.0
    %1539 = vmatpush1.msra.mxu0 0.0
    %1540 = vmatprep.subr.mxu0 0.0
    %1541 = vmatpush1.msra.mxu0 0.0
    %1542 = vmatprep.subr.mxu0 0.0
    %1543 = vmatpush1.msra.mxu0 0.0
    %1544 = vmatprep.subr.mxu0 0.0
    %1545 = vmatpush1.msra.mxu0 0.0
    %1546 = vmatprep.subr.mxu0 0.0
    %1547 = vmatpush1.msra.mxu0 0.0
    %1548 = vmatprep.subr.mxu0 0.0
    %1549 = vmatpush1.msra.mxu0 0.0
    %1550 = vmatprep.subr.mxu0 0.0
    %1551 = vmatpush1.msra.mxu0 0.0
    %1552 = vmatprep.subr.mxu0 0.0
    %1553 = vmatpush1.msra.mxu0 0.0
    %1554 = vmatprep.subr.mxu0 0.0
    %1555 = vmatpush1.msra.mxu0 0.0
    %1556 = vmatprep.subr.mxu0 0.0
    %1557 = vmatpush1.msra.mxu0 0.0
    %1558 = vmatprep.subr.mxu0 0.0
    %1559 = vmatpush1.msra.mxu0 0.0
    %1560 = vmatprep.subr.mxu0 0.0
    %1561 = vmatpush1.msra.mxu0 0.0
    %1562 = vmatprep.subr.mxu0 0.0
    %1563 = vmatpush1.msra.mxu0 0.0
    %1564 = vmatprep.subr.mxu0 0.0
    %1565 = vmatpush1.msra.mxu0 0.0
    %1566 = vmatprep.subr.mxu0 0.0
    %1567 = vmatpush1.msra.mxu0 0.0
    %1568 = vmatprep.subr.mxu0 0.0
    %1569 = vmatpush1.msra.mxu0 0.0
    %1570 = vmatprep.subr.mxu0 0.0
    %1571 = vmatpush1.msra.mxu0 0.0
    %1572 = vmatprep.subr.mxu0 0.0
    %1573 = vmatpush1.msra.mxu0 0.0
    %1574 = vmatprep.subr.mxu0 0.0
    %1575 = vmatpush1.msra.mxu0 0.0
    %1576 = vmatprep.subr.mxu0 0.0
    %1577 = vmatpush1.msra.mxu0 0.0
    %1578 = vmatprep.subr.mxu0 0.0
    %1579 = vmatpush1.msra.mxu0 0.0
    %1580 = vmatprep.subr.mxu0 0.0
    %1581 = vmatpush1.msra.mxu0 0.0
    %1582 = vmatprep.subr.mxu0 0.0
    %1583 = vmatpush1.msra.mxu0 0.0
    %1584 = vmatprep.subr.mxu0 0.0
    %1585 = vmatpush1.msra.mxu0 0.0
    %1586 = vmatprep.subr.mxu0 0.0
    %1587 = vmatpush1.msra.mxu0 0.0
    %1588 = vmatprep.subr.mxu0 0.0
    %1589 = vmatpush1.msra.mxu0 0.0
    %1590 = vmatprep.subr.mxu0 0.0
    %1591 = vmatpush1.msra.mxu0 0.0
    %1592 = vmatprep.subr.mxu0 0.0
    %1593 = vmatpush1.msra.mxu0 0.0
    %1594 = vmatprep.mubr.f32.mxu0 0.0
    %1595 = vmatmul.mubr.f32.gmra.mrb[0].mxu0 %v1451
    %v1596 = vpop.f32.mrb[0].mxu0
    %v1597 = vadd.f32 %v1297, %v1596
    %v1598 = vpop.f32.mrb[0].mxu0
    %1599 = vdwg.mxu0
    %v1600 = vadd.f32 %v1597, %v392
    %v1601 = vlaneseq
    %v1602 = vshrl.u32 %v1601, 7
    %v1603 = vsub.s32 0, %v1602
    %v1604 = vrot.slane %v1529, %v1603
    %v1605 = vadd.f32 %v1600, %v1604
    %v1606 = vld [vmem:[%s6 + $0x242] sm:$0x1]
    %1607 = vmatprep.subr.mxu0 0.0
    %1608 = vmatpush1.msra.mxu0 %v159
    %1609 = vmatprep.subr.mxu0 0.0
    %1610 = vmatpush1.msra.mxu0 %v160
    %1611 = vmatprep.subr.mxu0 0.0
    %1612 = vmatpush1.msra.mxu0 0.0
    %1613 = vmatprep.subr.mxu0 0.0
    %1614 = vmatpush1.msra.mxu0 0.0
    %1615 = vmatprep.subr.mxu0 0.0
    %1616 = vmatpush1.msra.mxu0 0.0
    %1617 = vmatprep.subr.mxu0 0.0
    %1618 = vmatpush1.msra.mxu0 0.0
    %1619 = vmatprep.subr.mxu0 0.0
    %1620 = vmatpush1.msra.mxu0 0.0
    %1621 = vmatprep.subr.mxu0 0.0
    %1622 = vmatpush1.msra.mxu0 0.0
    %1623 = vmatprep.subr.mxu0 0.0
    %1624 = vmatpush1.msra.mxu0 0.0
    %1625 = vmatprep.subr.mxu0 0.0
    %1626 = vmatpush1.msra.mxu0 0.0
    %1627 = vmatprep.subr.mxu0 0.0
    %1628 = vmatpush1.msra.mxu0 0.0
    %1629 = vmatprep.subr.mxu0 0.0
    %1630 = vmatpush1.msra.mxu0 0.0
    %1631 = vmatprep.subr.mxu0 0.0
    %1632 = vmatpush1.msra.mxu0 0.0
    %1633 = vmatprep.subr.mxu0 0.0
    %1634 = vmatpush1.msra.mxu0 0.0
    %1635 = vmatprep.subr.mxu0 0.0
    %1636 = vmatpush1.msra.mxu0 0.0
    %1637 = vmatprep.subr.mxu0 0.0
    %1638 = vmatpush1.msra.mxu0 0.0
    %1639 = vmatprep.subr.mxu0 0.0
    %1640 = vmatpush1.msra.mxu0 0.0
    %1641 = vmatprep.subr.mxu0 0.0
    %1642 = vmatpush1.msra.mxu0 0.0
    %1643 = vmatprep.subr.mxu0 0.0
    %1644 = vmatpush1.msra.mxu0 0.0
    %1645 = vmatprep.subr.mxu0 0.0
    %1646 = vmatpush1.msra.mxu0 0.0
    %1647 = vmatprep.subr.mxu0 0.0
    %1648 = vmatpush1.msra.mxu0 0.0
    %1649 = vmatprep.subr.mxu0 0.0
    %1650 = vmatpush1.msra.mxu0 0.0
    %1651 = vmatprep.subr.mxu0 0.0
    %1652 = vmatpush1.msra.mxu0 0.0
    %1653 = vmatprep.subr.mxu0 0.0
    %1654 = vmatpush1.msra.mxu0 0.0
    %1655 = vmatprep.subr.mxu0 0.0
    %1656 = vmatpush1.msra.mxu0 0.0
    %1657 = vmatprep.subr.mxu0 0.0
    %1658 = vmatpush1.msra.mxu0 0.0
    %1659 = vmatprep.subr.mxu0 0.0
    %1660 = vmatpush1.msra.mxu0 0.0
    %1661 = vmatprep.subr.mxu0 0.0
    %1662 = vmatpush1.msra.mxu0 0.0
    %1663 = vmatprep.subr.mxu0 0.0
    %1664 = vmatpush1.msra.mxu0 0.0
    %1665 = vmatprep.subr.mxu0 0.0
    %1666 = vmatpush1.msra.mxu0 0.0
    %1667 = vmatprep.subr.mxu0 0.0
    %1668 = vmatpush1.msra.mxu0 0.0
    %1669 = vmatprep.subr.mxu0 0.0
    %1670 = vmatpush1.msra.mxu0 0.0
    %1671 = vmatprep.mubr.f32.mxu0 0.0
    %1672 = vmatmul.mubr.f32.gmra.mrb[0].mxu0 %v1451
    %v1673 = vpop.f32.mrb[0].mxu0
    %v1674 = vadd.f32 %v1371, %v1673
    %v1675 = vpop.f32.mrb[0].mxu0
    %1676 = vdwg.mxu0
    %v1677 = vadd.f32 %v1674, %v540
    %v1678 = vlaneseq
    %v1679 = vshrl.u32 %v1678, 7
    %v1680 = vsub.s32 0, %v1679
    %v1681 = vrot.slane %v1606, %v1680
    %v1682 = vadd.f32 %v1677, %v1681
    %v1683 = vld [vmem:[%s6 + $0x243] sm:$0x1]
    %1684 = vmatprep.subr.mxu0 0.0
    %1685 = vmatpush1.msra.mxu0 %v161
    %1686 = vmatprep.subr.mxu0 0.0
    %1687 = vmatpush1.msra.mxu0 %v162
    %1688 = vmatprep.subr.mxu0 0.0
    %1689 = vmatpush1.msra.mxu0 0.0
    %1690 = vmatprep.subr.mxu0 0.0
    %1691 = vmatpush1.msra.mxu0 0.0
    %1692 = vmatprep.subr.mxu0 0.0
    %1693 = vmatpush1.msra.mxu0 0.0
    %1694 = vmatprep.subr.mxu0 0.0
    %1695 = vmatpush1.msra.mxu0 0.0
    %1696 = vmatprep.subr.mxu0 0.0
    %1697 = vmatpush1.msra.mxu0 0.0
    %1698 = vmatprep.subr.mxu0 0.0
    %1699 = vmatpush1.msra.mxu0 0.0
    %1700 = vmatprep.subr.mxu0 0.0
    %1701 = vmatpush1.msra.mxu0 0.0
    %1702 = vmatprep.subr.mxu0 0.0
    %1703 = vmatpush1.msra.mxu0 0.0
    %1704 = vmatprep.subr.mxu0 0.0
    %1705 = vmatpush1.msra.mxu0 0.0
    %1706 = vmatprep.subr.mxu0 0.0
    %1707 = vmatpush1.msra.mxu0 0.0
    %1708 = vmatprep.subr.mxu0 0.0
    %1709 = vmatpush1.msra.mxu0 0.0
    %1710 = vmatprep.subr.mxu0 0.0
    %1711 = vmatpush1.msra.mxu0 0.0
    %1712 = vmatprep.subr.mxu0 0.0
    %1713 = vmatpush1.msra.mxu0 0.0
    %1714 = vmatprep.subr.mxu0 0.0
    %1715 = vmatpush1.msra.mxu0 0.0
    %1716 = vmatprep.subr.mxu0 0.0
    %1717 = vmatpush1.msra.mxu0 0.0
    %1718 = vmatprep.subr.mxu0 0.0
    %1719 = vmatpush1.msra.mxu0 0.0
    %1720 = vmatprep.subr.mxu0 0.0
    %1721 = vmatpush1.msra.mxu0 0.0
    %1722 = vmatprep.subr.mxu0 0.0
    %1723 = vmatpush1.msra.mxu0 0.0
    %1724 = vmatprep.subr.mxu0 0.0
    %1725 = vmatpush1.msra.mxu0 0.0
    %1726 = vmatprep.subr.mxu0 0.0
    %1727 = vmatpush1.msra.mxu0 0.0
    %1728 = vmatprep.subr.mxu0 0.0
    %1729 = vmatpush1.msra.mxu0 0.0
    %1730 = vmatprep.subr.mxu0 0.0
    %1731 = vmatpush1.msra.mxu0 0.0
    %1732 = vmatprep.subr.mxu0 0.0
    %1733 = vmatpush1.msra.mxu0 0.0
    %1734 = vmatprep.subr.mxu0 0.0
    %1735 = vmatpush1.msra.mxu0 0.0
    %1736 = vmatprep.subr.mxu0 0.0
    %1737 = vmatpush1.msra.mxu0 0.0
    %1738 = vmatprep.subr.mxu0 0.0
    %1739 = vmatpush1.msra.mxu0 0.0
    %1740 = vmatprep.subr.mxu0 0.0
    %1741 = vmatpush1.msra.mxu0 0.0
    %1742 = vmatprep.subr.mxu0 0.0
    %1743 = vmatpush1.msra.mxu0 0.0
    %1744 = vmatprep.subr.mxu0 0.0
    %1745 = vmatpush1.msra.mxu0 0.0
    %1746 = vmatprep.subr.mxu0 0.0
    %1747 = vmatpush1.msra.mxu0 0.0
    %1748 = vmatprep.mubr.f32.mxu0 0.0
    %1749 = vmatmul.mubr.f32.gmra.mrb[0].mxu0 %v1451
    %v1750 = vpop.f32.mrb[0].mxu0
    %v1751 = vadd.f32 %v1445, %v1750
    %v1752 = vpop.f32.mrb[0].mxu0
    %1753 = vdwg.mxu0
    %v1754 = vadd.f32 %v1751, %v688
    %v1755 = vlaneseq
    %v1756 = vshrl.u32 %v1755, 7
    %v1757 = vsub.s32 0, %v1756
    %v1758 = vrot.slane %v1683, %v1757
    %v1759 = vadd.f32 %v1754, %v1758
    %v1760 = vxor.u32 %v1528, 2147483648
    %v1761 = vmul.f32 %v1760, 1.442695
    %v1762 = vpow.pop %v1761
    %v1763 = vadd.f32 %v1762, 1.0
    %v1764 = vrcp.pop %v1763
    %v1765 = vmul.f32 1.0, %v1764
    %v1766 = vxor.u32 %v1605, 2147483648
    %v1767 = vmul.f32 %v1766, 1.442695
    %v1768 = vpow.pop %v1767
    %v1769 = vadd.f32 %v1768, 1.0
    %v1770 = vrcp.pop %v1769
    %v1771 = vmul.f32 1.0, %v1770
    %v1772 = vtanh.pop %v1682
    %v1773 = vxor.u32 %v1759, 2147483648
    %v1774 = vmul.f32 %v1773, 1.442695
    %v1775 = vpow.pop %v1774
    %v1776 = vadd.f32 %v1775, 1.0
    %v1777 = vrcp.pop %v1776
    %v1778 = vmul.f32 1.0, %v1777
    %v1779 = vmul.f32 %v1771, %v64
    %v1780 = vmul.f32 %v1765, %v1772
    %v1781 = vadd.f32 %v1779, %v1780
    %v1782 = vtanh.pop %v1781
    %v1783 = vmul.f32 %v1778, %v1782
    %v1784 = vld [vmem:[%s6 + $0x244] sm:$0x1]
    %v1785 = vld [vmem:[%s6 + $0xc0] sm:$0xff]
    %v1786 = vld [vmem:[%s6 + $0xc8] sm:$0xff]
    %v1787 = vld [vmem:[%s6 + $0xd0] sm:$0xff]
    %v1788 = vld [vmem:[%s6 + $0xd8] sm:$0xff]
    %v1790 = vsel %vm81, %v1783, 0
    %1792 = vmatprep.subr.mxu0 0.0
    %1793 = vmatpush1.msra.mxu0 %v1785
    %1794 = vmatprep.subr.mxu0 0.0
    %1795 = vmatpush1.msra.mxu0 %v1786
    %1796 = vmatprep.subr.mxu0 0.0
    %1797 = vmatpush1.msra.mxu0 %v1787
    %1798 = vmatprep.subr.mxu0 0.0
    %1799 = vmatpush1.msra.mxu0 %v1788
    %1800 = vmatprep.subr.mxu0 0.0
    %1801 = vmatpush1.msra.mxu0 0.0
    %1802 = vmatprep.subr.mxu0 0.0
    %1803 = vmatpush1.msra.mxu0 0.0
    %1804 = vmatprep.subr.mxu0 0.0
    %1805 = vmatpush1.msra.mxu0 0.0
    %1806 = vmatprep.subr.mxu0 0.0
    %1807 = vmatpush1.msra.mxu0 0.0
    %1808 = vmatprep.subr.mxu0 0.0
    %1809 = vmatpush1.msra.mxu0 0.0
    %1810 = vmatprep.subr.mxu0 0.0
    %1811 = vmatpush1.msra.mxu0 0.0
    %1812 = vmatprep.subr.mxu0 0.0
    %1813 = vmatpush1.msra.mxu0 0.0
    %1814 = vmatprep.subr.mxu0 0.0
    %1815 = vmatpush1.msra.mxu0 0.0
    %1816 = vmatprep.subr.mxu0 0.0
    %1817 = vmatpush1.msra.mxu0 0.0
    %1818 = vmatprep.subr.mxu0 0.0
    %1819 = vmatpush1.msra.mxu0 0.0
    %1820 = vmatprep.subr.mxu0 0.0
    %1821 = vmatpush1.msra.mxu0 0.0
    %1822 = vmatprep.subr.mxu0 0.0
    %1823 = vmatpush1.msra.mxu0 0.0
    %1824 = vmatprep.subr.mxu0 0.0
    %1825 = vmatpush1.msra.mxu0 0.0
    %1826 = vmatprep.subr.mxu0 0.0
    %1827 = vmatpush1.msra.mxu0 0.0
    %1828 = vmatprep.subr.mxu0 0.0
    %1829 = vmatpush1.msra.mxu0 0.0
    %1830 = vmatprep.subr.mxu0 0.0
    %1831 = vmatpush1.msra.mxu0 0.0
    %1832 = vmatprep.subr.mxu0 0.0
    %1833 = vmatpush1.msra.mxu0 0.0
    %1834 = vmatprep.subr.mxu0 0.0
    %1835 = vmatpush1.msra.mxu0 0.0
    %1836 = vmatprep.subr.mxu0 0.0
    %1837 = vmatpush1.msra.mxu0 0.0
    %1838 = vmatprep.subr.mxu0 0.0
    %1839 = vmatpush1.msra.mxu0 0.0
    %1840 = vmatprep.subr.mxu0 0.0
    %1841 = vmatpush1.msra.mxu0 0.0
    %1842 = vmatprep.subr.mxu0 0.0
    %1843 = vmatpush1.msra.mxu0 0.0
    %1844 = vmatprep.subr.mxu0 0.0
    %1845 = vmatpush1.msra.mxu0 0.0
    %1846 = vmatprep.subr.mxu0 0.0
    %1847 = vmatpush1.msra.mxu0 0.0
    %1848 = vmatprep.subr.mxu0 0.0
    %1849 = vmatpush1.msra.mxu0 0.0
    %1850 = vmatprep.subr.mxu0 0.0
    %1851 = vmatpush1.msra.mxu0 0.0
    %1852 = vmatprep.subr.mxu0 0.0
    %1853 = vmatpush1.msra.mxu0 0.0
    %1854 = vmatprep.subr.mxu0 0.0
    %1855 = vmatpush1.msra.mxu0 0.0
    %1856 = vmatprep.mubr.f32.mxu0 0.0
    %1857 = vmatmul.mubr.f32.gmra.mrb[0].mxu0 %v1790
    %v1858 = vpop.f32.mrb[0].mxu0
    %v1859 = vadd.f32 %v314, %v1858
    %v1860 = vpop.f32.mrb[0].mxu0
    %1861 = vdwg.mxu0
    %v1862 = vlaneseq
    %v1863 = vshrl.u32 %v1862, 7
    %v1864 = vsub.s32 0, %v1863
    %v1865 = vrot.slane %v1784, %v1864
    %v1866 = vadd.f32 %v1859, %v1865
    %v1867 = vld [vmem:[%s6 + $0x245] sm:$0x1]
    %v1868 = vld [vmem:[%s6 + $0xe0] sm:$0xff]
    %v1869 = vld [vmem:[%s6 + $0xe8] sm:$0xff]
    %v1870 = vld [vmem:[%s6 + $0xf0] sm:$0xff]
    %v1871 = vld [vmem:[%s6 + $0xf8] sm:$0xff]
    %1872 = vmatprep.subr.mxu0 0.0
    %1873 = vmatpush1.msra.mxu0 %v1868
    %1874 = vmatprep.subr.mxu0 0.0
    %1875 = vmatpush1.msra.mxu0 %v1869
    %1876 = vmatprep.subr.mxu0 0.0
    %1877 = vmatpush1.msra.mxu0 %v1870
    %1878 = vmatprep.subr.mxu0 0.0
    %1879 = vmatpush1.msra.mxu0 %v1871
    %1880 = vmatprep.subr.mxu0 0.0
    %1881 = vmatpush1.msra.mxu0 0.0
    %1882 = vmatprep.subr.mxu0 0.0
    %1883 = vmatpush1.msra.mxu0 0.0
    %1884 = vmatprep.subr.mxu0 0.0
    %1885 = vmatpush1.msra.mxu0 0.0
    %1886 = vmatprep.subr.mxu0 0.0
    %1887 = vmatpush1.msra.mxu0 0.0
    %1888 = vmatprep.subr.mxu0 0.0
    %1889 = vmatpush1.msra.mxu0 0.0
    %1890 = vmatprep.subr.mxu0 0.0
    %1891 = vmatpush1.msra.mxu0 0.0
    %1892 = vmatprep.subr.mxu0 0.0
    %1893 = vmatpush1.msra.mxu0 0.0
    %1894 = vmatprep.subr.mxu0 0.0
    %1895 = vmatpush1.msra.mxu0 0.0
    %1896 = vmatprep.subr.mxu0 0.0
    %1897 = vmatpush1.msra.mxu0 0.0
    %1898 = vmatprep.subr.mxu0 0.0
    %1899 = vmatpush1.msra.mxu0 0.0
    %1900 = vmatprep.subr.mxu0 0.0
    %1901 = vmatpush1.msra.mxu0 0.0
    %1902 = vmatprep.subr.mxu0 0.0
    %1903 = vmatpush1.msra.mxu0 0.0
    %1904 = vmatprep.subr.mxu0 0.0
    %1905 = vmatpush1.msra.mxu0 0.0
    %1906 = vmatprep.subr.mxu0 0.0
    %1907 = vmatpush1.msra.mxu0 0.0
    %1908 = vmatprep.subr.mxu0 0.0
    %1909 = vmatpush1.msra.mxu0 0.0
    %1910 = vmatprep.subr.mxu0 0.0
    %1911 = vmatpush1.msra.mxu0 0.0
    %1912 = vmatprep.subr.mxu0 0.0
    %1913 = vmatpush1.msra.mxu0 0.0
    %1914 = vmatprep.subr.mxu0 0.0
    %1915 = vmatpush1.msra.mxu0 0.0
    %1916 = vmatprep.subr.mxu0 0.0
    %1917 = vmatpush1.msra.mxu0 0.0
    %1918 = vmatprep.subr.mxu0 0.0
    %1919 = vmatpush1.msra.mxu0 0.0
    %1920 = vmatprep.subr.mxu0 0.0
    %1921 = vmatpush1.msra.mxu0 0.0
    %1922 = vmatprep.subr.mxu0 0.0
    %1923 = vmatpush1.msra.mxu0 0.0
    %1924 = vmatprep.subr.mxu0 0.0
    %1925 = vmatpush1.msra.mxu0 0.0
    %1926 = vmatprep.subr.mxu0 0.0
    %1927 = vmatpush1.msra.mxu0 0.0
    %1928 = vmatprep.subr.mxu0 0.0
    %1929 = vmatpush1.msra.mxu0 0.0
    %1930 = vmatprep.subr.mxu0 0.0
    %1931 = vmatpush1.msra.mxu0 0.0
    %1932 = vmatprep.subr.mxu0 0.0
    %1933 = vmatpush1.msra.mxu0 0.0
    %1934 = vmatprep.subr.mxu0 0.0
    %1935 = vmatpush1.msra.mxu0 0.0
    %1936 = vmatprep.mubr.f32.mxu0 0.0
    %1937 = vmatmul.mubr.f32.gmra.mrb[0].mxu0 %v1790
    %v1938 = vpop.f32.mrb[0].mxu0
    %v1939 = vadd.f32 %v462, %v1938
    %v1940 = vpop.f32.mrb[0].mxu0
    %1941 = vdwg.mxu0
    %v1942 = vlaneseq
    %v1943 = vshrl.u32 %v1942, 7
    %v1944 = vsub.s32 0, %v1943
    %v1945 = vrot.slane %v1867, %v1944
    %v1946 = vadd.f32 %v1939, %v1945
    %v1947 = vld [vmem:[%s6 + $0x246] sm:$0x1]
    %v1948 = vld [vmem:[%s6 + $0x100] sm:$0xff]
    %v1949 = vld [vmem:[%s6 + $0x108] sm:$0xff]
    %v1950 = vld [vmem:[%s6 + $0x110] sm:$0xff]
    %v1951 = vld [vmem:[%s6 + $0x118] sm:$0xff]
    %1952 = vmatprep.subr.mxu0 0.0
    %1953 = vmatpush1.msra.mxu0 %v1948
    %1954 = vmatprep.subr.mxu0 0.0
    %1955 = vmatpush1.msra.mxu0 %v1949
    %1956 = vmatprep.subr.mxu0 0.0
    %1957 = vmatpush1.msra.mxu0 %v1950
    %1958 = vmatprep.subr.mxu0 0.0
    %1959 = vmatpush1.msra.mxu0 %v1951
    %1960 = vmatprep.subr.mxu0 0.0
    %1961 = vmatpush1.msra.mxu0 0.0
    %1962 = vmatprep.subr.mxu0 0.0
    %1963 = vmatpush1.msra.mxu0 0.0
    %1964 = vmatprep.subr.mxu0 0.0
    %1965 = vmatpush1.msra.mxu0 0.0
    %1966 = vmatprep.subr.mxu0 0.0
    %1967 = vmatpush1.msra.mxu0 0.0
    %1968 = vmatprep.subr.mxu0 0.0
    %1969 = vmatpush1.msra.mxu0 0.0
    %1970 = vmatprep.subr.mxu0 0.0
    %1971 = vmatpush1.msra.mxu0 0.0
    %1972 = vmatprep.subr.mxu0 0.0
    %1973 = vmatpush1.msra.mxu0 0.0
    %1974 = vmatprep.subr.mxu0 0.0
    %1975 = vmatpush1.msra.mxu0 0.0
    %1976 = vmatprep.subr.mxu0 0.0
    %1977 = vmatpush1.msra.mxu0 0.0
    %1978 = vmatprep.subr.mxu0 0.0
    %1979 = vmatpush1.msra.mxu0 0.0
    %1980 = vmatprep.subr.mxu0 0.0
    %1981 = vmatpush1.msra.mxu0 0.0
    %1982 = vmatprep.subr.mxu0 0.0
    %1983 = vmatpush1.msra.mxu0 0.0
    %1984 = vmatprep.subr.mxu0 0.0
    %1985 = vmatpush1.msra.mxu0 0.0
    %1986 = vmatprep.subr.mxu0 0.0
    %1987 = vmatpush1.msra.mxu0 0.0
    %1988 = vmatprep.subr.mxu0 0.0
    %1989 = vmatpush1.msra.mxu0 0.0
    %1990 = vmatprep.subr.mxu0 0.0
    %1991 = vmatpush1.msra.mxu0 0.0
    %1992 = vmatprep.subr.mxu0 0.0
    %1993 = vmatpush1.msra.mxu0 0.0
    %1994 = vmatprep.subr.mxu0 0.0
    %1995 = vmatpush1.msra.mxu0 0.0
    %1996 = vmatprep.subr.mxu0 0.0
    %1997 = vmatpush1.msra.mxu0 0.0
    %1998 = vmatprep.subr.mxu0 0.0
    %1999 = vmatpush1.msra.mxu0 0.0
    %2000 = vmatprep.subr.mxu0 0.0
    %2001 = vmatpush1.msra.mxu0 0.0
    %2002 = vmatprep.subr.mxu0 0.0
    %2003 = vmatpush1.msra.mxu0 0.0
    %2004 = vmatprep.subr.mxu0 0.0
    %2005 = vmatpush1.msra.mxu0 0.0
    %2006 = vmatprep.subr.mxu0 0.0
    %2007 = vmatpush1.msra.mxu0 0.0
    %2008 = vmatprep.subr.mxu0 0.0
    %2009 = vmatpush1.msra.mxu0 0.0
    %2010 = vmatprep.subr.mxu0 0.0
    %2011 = vmatpush1.msra.mxu0 0.0
    %2012 = vmatprep.subr.mxu0 0.0
    %2013 = vmatpush1.msra.mxu0 0.0
    %2014 = vmatprep.subr.mxu0 0.0
    %2015 = vmatpush1.msra.mxu0 0.0
    %2016 = vmatprep.mubr.f32.mxu0 0.0
    %2017 = vmatmul.mubr.f32.gmra.mrb[0].mxu0 %v1790
    %v2018 = vpop.f32.mrb[0].mxu0
    %v2019 = vadd.f32 %v610, %v2018
    %v2020 = vpop.f32.mrb[0].mxu0
    %2021 = vdwg.mxu0
    %v2022 = vlaneseq
    %v2023 = vshrl.u32 %v2022, 7
    %v2024 = vsub.s32 0, %v2023
    %v2025 = vrot.slane %v1947, %v2024
    %v2026 = vadd.f32 %v2019, %v2025
    %v2027 = vld [vmem:[%s6 + $0x247] sm:$0x1]
    %v2028 = vld [vmem:[%s6 + $0x120] sm:$0xff]
    %v2029 = vld [vmem:[%s6 + $0x128] sm:$0xff]
    %v2030 = vld [vmem:[%s6 + $0x130] sm:$0xff]
    %v2031 = vld [vmem:[%s6 + $0x138] sm:$0xff]
    %2032 = vmatprep.subr.mxu0 0.0
    %2033 = vmatpush1.msra.mxu0 %v2028
    %2034 = vmatprep.subr.mxu0 0.0
    %2035 = vmatpush1.msra.mxu0 %v2029
    %2036 = vmatprep.subr.mxu0 0.0
    %2037 = vmatpush1.msra.mxu0 %v2030
    %2038 = vmatprep.subr.mxu0 0.0
    %2039 = vmatpush1.msra.mxu0 %v2031
    %2040 = vmatprep.subr.mxu0 0.0
    %2041 = vmatpush1.msra.mxu0 0.0
    %2042 = vmatprep.subr.mxu0 0.0
    %2043 = vmatpush1.msra.mxu0 0.0
    %2044 = vmatprep.subr.mxu0 0.0
    %2045 = vmatpush1.msra.mxu0 0.0
    %2046 = vmatprep.subr.mxu0 0.0
    %2047 = vmatpush1.msra.mxu0 0.0
    %2048 = vmatprep.subr.mxu0 0.0
    %2049 = vmatpush1.msra.mxu0 0.0
    %2050 = vmatprep.subr.mxu0 0.0
    %2051 = vmatpush1.msra.mxu0 0.0
    %2052 = vmatprep.subr.mxu0 0.0
    %2053 = vmatpush1.msra.mxu0 0.0
    %2054 = vmatprep.subr.mxu0 0.0
    %2055 = vmatpush1.msra.mxu0 0.0
    %2056 = vmatprep.subr.mxu0 0.0
    %2057 = vmatpush1.msra.mxu0 0.0
    %2058 = vmatprep.subr.mxu0 0.0
    %2059 = vmatpush1.msra.mxu0 0.0
    %2060 = vmatprep.subr.mxu0 0.0
    %2061 = vmatpush1.msra.mxu0 0.0
    %2062 = vmatprep.subr.mxu0 0.0
    %2063 = vmatpush1.msra.mxu0 0.0
    %2064 = vmatprep.subr.mxu0 0.0
    %2065 = vmatpush1.msra.mxu0 0.0
    %2066 = vmatprep.subr.mxu0 0.0
    %2067 = vmatpush1.msra.mxu0 0.0
    %2068 = vmatprep.subr.mxu0 0.0
    %2069 = vmatpush1.msra.mxu0 0.0
    %2070 = vmatprep.subr.mxu0 0.0
    %2071 = vmatpush1.msra.mxu0 0.0
    %2072 = vmatprep.subr.mxu0 0.0
    %2073 = vmatpush1.msra.mxu0 0.0
    %2074 = vmatprep.subr.mxu0 0.0
    %2075 = vmatpush1.msra.mxu0 0.0
    %2076 = vmatprep.subr.mxu0 0.0
    %2077 = vmatpush1.msra.mxu0 0.0
    %2078 = vmatprep.subr.mxu0 0.0
    %2079 = vmatpush1.msra.mxu0 0.0
    %2080 = vmatprep.subr.mxu0 0.0
    %2081 = vmatpush1.msra.mxu0 0.0
    %2082 = vmatprep.subr.mxu0 0.0
    %2083 = vmatpush1.msra.mxu0 0.0
    %2084 = vmatprep.subr.mxu0 0.0
    %2085 = vmatpush1.msra.mxu0 0.0
    %2086 = vmatprep.subr.mxu0 0.0
    %2087 = vmatpush1.msra.mxu0 0.0
    %2088 = vmatprep.subr.mxu0 0.0
    %2089 = vmatpush1.msra.mxu0 0.0
    %2090 = vmatprep.subr.mxu0 0.0
    %2091 = vmatpush1.msra.mxu0 0.0
    %2092 = vmatprep.subr.mxu0 0.0
    %2093 = vmatpush1.msra.mxu0 0.0
    %2094 = vmatprep.subr.mxu0 0.0
    %2095 = vmatpush1.msra.mxu0 0.0
    %2096 = vmatprep.mubr.f32.mxu0 0.0
    %2097 = vmatmul.mubr.f32.gmra.mrb[0].mxu0 %v1790
    %v2098 = vpop.f32.mrb[0].mxu0
    %v2099 = vadd.f32 %v758, %v2098
    %v2100 = vpop.f32.mrb[0].mxu0
    %2101 = vdwg.mxu0
    %v2102 = vlaneseq
    %v2103 = vshrl.u32 %v2102, 7
    %v2104 = vsub.s32 0, %v2103
    %v2105 = vrot.slane %v2027, %v2104
    %v2106 = vadd.f32 %v2099, %v2105
    %v2107 = vxor.u32 %v1866, 2147483648
    %v2108 = vmul.f32 %v2107, 1.442695
    %v2109 = vpow.pop %v2108
    %v2110 = vadd.f32 %v2109, 1.0
    %v2111 = vrcp.pop %v2110
    %v2112 = vmul.f32 1.0, %v2111
    %v2113 = vxor.u32 %v1946, 2147483648
    %v2114 = vmul.f32 %v2113, 1.442695
    %v2115 = vpow.pop %v2114
    %v2116 = vadd.f32 %v2115, 1.0
    %v2117 = vrcp.pop %v2116
    %v2118 = vmul.f32 1.0, %v2117
    %v2119 = vtanh.pop %v2026
    %v2120 = vxor.u32 %v2106, 2147483648
    %v2121 = vmul.f32 %v2120, 1.442695
    %v2122 = vpow.pop %v2121
    %v2123 = vadd.f32 %v2122, 1.0
    %v2124 = vrcp.pop %v2123
    %v2125 = vmul.f32 1.0, %v2124
    %v2126 = vmul.f32 %v2118, %v65
    %v2127 = vmul.f32 %v2112, %v2119
    %v2128 = vadd.f32 %v2126, %v2127
    %v2129 = vtanh.pop %v2128
    %v2130 = vmul.f32 %v2125, %v2129
    %vm2131 = vcmask 254976
    %2132 = vst.msk [vmem:[#allocation8] sm:$0x3] %vm2131, %v1783
    %2133 = vst.msk [vmem:[#allocation8 + $0x2] sm:$0x3] %vm2131, %v2130
    %2134 = vst.msk [vmem:[#allocation10] sm:$0x3] %vm2131, %v1781
    %2135 = vst.msk [vmem:[#allocation10 + $0x2] sm:$0x3] %vm2131, %v2128
    %v2136 = vld [vmem:[%s7] sm:$0xff]
    %v2137 = vld [vmem:[%s7 + $0x8] sm:$0xff]
    %v2138 = vld [vmem:[%s7 + $0x10] sm:$0xff]
    %v2139 = vld [vmem:[%s7 + $0x18] sm:$0xff]
    %v2140 = vld [vmem:[%s7 + $0x40] sm:$0x1]
    %v2142 = vsel %vm81, %v2130, 0
    %2144 = vmatprep.subr.mxu0 0.0
    %2145 = vmatpush1.msra.mxu0 %v2136
    %2146 = vmatprep.subr.mxu0 0.0
    %2147 = vmatpush1.msra.mxu0 %v2137
    %2148 = vmatprep.subr.mxu0 0.0
    %2149 = vmatpush1.msra.mxu0 %v2138
    %2150 = vmatprep.subr.mxu0 0.0
    %2151 = vmatpush1.msra.mxu0 %v2139
    %2152 = vmatprep.subr.mxu0 0.0
    %2153 = vmatpush1.msra.mxu0 0.0
    %2154 = vmatprep.subr.mxu0 0.0
    %2155 = vmatpush1.msra.mxu0 0.0
    %2156 = vmatprep.subr.mxu0 0.0
    %2157 = vmatpush1.msra.mxu0 0.0
    %2158 = vmatprep.subr.mxu0 0.0
    %2159 = vmatpush1.msra.mxu0 0.0
    %2160 = vmatprep.subr.mxu0 0.0
    %2161 = vmatpush1.msra.mxu0 0.0
    %2162 = vmatprep.subr.mxu0 0.0
    %2163 = vmatpush1.msra.mxu0 0.0
    %2164 = vmatprep.subr.mxu0 0.0
    %2165 = vmatpush1.msra.mxu0 0.0
    %2166 = vmatprep.subr.mxu0 0.0
    %2167 = vmatpush1.msra.mxu0 0.0
    %2168 = vmatprep.subr.mxu0 0.0
    %2169 = vmatpush1.msra.mxu0 0.0
    %2170 = vmatprep.subr.mxu0 0.0
    %2171 = vmatpush1.msra.mxu0 0.0
    %2172 = vmatprep.subr.mxu0 0.0
    %2173 = vmatpush1.msra.mxu0 0.0
    %2174 = vmatprep.subr.mxu0 0.0
    %2175 = vmatpush1.msra.mxu0 0.0
    %2176 = vmatprep.subr.mxu0 0.0
    %2177 = vmatpush1.msra.mxu0 0.0
    %2178 = vmatprep.subr.mxu0 0.0
    %2179 = vmatpush1.msra.mxu0 0.0
    %2180 = vmatprep.subr.mxu0 0.0
    %2181 = vmatpush1.msra.mxu0 0.0
    %2182 = vmatprep.subr.mxu0 0.0
    %2183 = vmatpush1.msra.mxu0 0.0
    %2184 = vmatprep.subr.mxu0 0.0
    %2185 = vmatpush1.msra.mxu0 0.0
    %2186 = vmatprep.subr.mxu0 0.0
    %2187 = vmatpush1.msra.mxu0 0.0
    %2188 = vmatprep.subr.mxu0 0.0
    %2189 = vmatpush1.msra.mxu0 0.0
    %2190 = vmatprep.subr.mxu0 0.0
    %2191 = vmatpush1.msra.mxu0 0.0
    %2192 = vmatprep.subr.mxu0 0.0
    %2193 = vmatpush1.msra.mxu0 0.0
    %2194 = vmatprep.subr.mxu0 0.0
    %2195 = vmatpush1.msra.mxu0 0.0
    %2196 = vmatprep.subr.mxu0 0.0
    %2197 = vmatpush1.msra.mxu0 0.0
    %2198 = vmatprep.subr.mxu0 0.0
    %2199 = vmatpush1.msra.mxu0 0.0
    %2200 = vmatprep.subr.mxu0 0.0
    %2201 = vmatpush1.msra.mxu0 0.0
    %2202 = vmatprep.subr.mxu0 0.0
    %2203 = vmatpush1.msra.mxu0 0.0
    %2204 = vmatprep.subr.mxu0 0.0
    %2205 = vmatpush1.msra.mxu0 0.0
    %2206 = vmatprep.subr.mxu0 0.0
    %2207 = vmatpush1.msra.mxu0 0.0
    %2208 = vmatprep.mubr.f32.mxu0 0.0
    %2209 = vmatmul.mubr.f32.gmra.mrb[0].mxu0 %v2142
    %v2210 = vpop.f32.mrb[0].mxu0
    %v2211 = vadd.f32 %v1149, %v2210
    %v2212 = vpop.f32.mrb[0].mxu0
    %2213 = vdwg.mxu0
    %v2214 = vlaneseq
    %v2215 = vshrl.u32 %v2214, 7
    %v2216 = vsub.s32 0, %v2215
    %v2217 = vrot.slane %v2140, %v2216
    %v2218 = vadd.f32 %v2211, %v2217
    %2219 = vst.msk [vmem:[#allocation7] sm:$0x3] %vm2131, %v2218
    // Predicated region
    $region42: #{decoder_forward.1} parent=1 // pred_check
      _
    $region43: #{decoder_forward.1} parent=1 // pred_check_branch
      %2221 = sbr.rel (0) target = $region45
    $region44: #{decoder_forward.1} parent=1 // pred_region
      %s2223 = ssub.s32 32, 32
      %2224 = vsyncadd [#allocation4], %s2223
      %s2226 = sshll.u32 [#allocation7], 4
      %s2227 = int_to_ptr.vmem [resolvable:$true] %s2226
      %2229 = dma.vmem_to_hbm [thread:$0]  %s2227, 32, %s8, [#allocation4]
    $region45: #{decoder_forward.1} parent=1 // pred_fallthru
      _
    // Predicated region
    $region46: #{decoder_forward.1} parent=1 // pred_check
      _
    $region47: #{decoder_forward.1} parent=1 // pred_check_branch
      %2231 = sbr.rel (0) target = $region49
    $region48: #{decoder_forward.1} parent=1 // pred_region
      %s2233 = ssub.s32 64, 64
      %2234 = vsyncadd [#allocation9], %s2233
      %s2235 = sshll.u32 [#allocation8], 4
      %s2236 = int_to_ptr.vmem [resolvable:$true] %s2235
      %2241 = dma.vmem_to_hbm [thread:$0]  %s2236, 64, %s9, [#allocation9], 32, 32, 2
    $region49: #{decoder_forward.1} parent=1 // pred_fallthru
      _
    // Predicated region
    $region50: #{decoder_forward.1} parent=1 // pred_check
      _
    $region51: #{decoder_forward.1} parent=1 // pred_check_branch
      %2243 = sbr.rel (0) target = $region53
    $region52: #{decoder_forward.1} parent=1 // pred_region
      %s2245 = ssub.s32 64, 64
      %2246 = vsyncadd [#allocation9], %s2245
      %s2247 = sshll.u32 [#allocation10], 4
      %s2248 = int_to_ptr.vmem [resolvable:$true] %s2247
      %2253 = dma.vmem_to_hbm [thread:$0]  %s2248, 64, %s10, [#allocation9], 32, 32, 2
    $region53: #{decoder_forward.1} parent=1 // pred_fallthru
      _
    // Predicated region
    $region54: #{decoder_forward.1} parent=1 // pred_check
      _
    $region55: #{decoder_forward.1} parent=1 // pred_check_branch
      %2255 = sbr.rel (0) target = $region57
    $region56: #{decoder_forward.1} parent=1 // pred_region
      %2256 = dma.done [#allocation4], 32
    $region57: #{decoder_forward.1} parent=1 // pred_fallthru
      _
    // Predicated region
    $region58: #{decoder_forward.1} parent=1 // pred_check
      _
    $region59: #{decoder_forward.1} parent=1 // pred_check_branch
      %2258 = sbr.rel (0) target = $region61
    $region60: #{decoder_forward.1} parent=1 // pred_region
      %2259 = dma.done [#allocation9], 64
    $region61: #{decoder_forward.1} parent=1 // pred_fallthru
      _
    // Predicated region
    $region62: #{decoder_forward.1} parent=1 // pred_check
      _
    $region63: #{decoder_forward.1} parent=1 // pred_check_branch
      %2261 = sbr.rel (0) target = $region65
    $region64: #{decoder_forward.1} parent=1 // pred_region
      %2262 = dma.done [#allocation9], 64
    $region65: #{decoder_forward.1} parent=1 // pred_fallthru
      _
    %2263 = vsyncpa [#allocation3], 1
    %2264 = vsyncpa [#allocation6], 1
    %2265 = vsyncpa [#allocation4], 1
    %2266 = vsyncpa [#allocation9], 1

</llo_original>
